<compile_context>
chip_gen: v5e
topology: v5e:2x2
jax: 0.10.0
libtpu: 0.0.40
codegen_flags: <defaults>
</compile_context>

<pallas_src>
import functools

import jax
import jax.numpy as jnp
from jax.experimental import pallas as pl
from jax.experimental.pallas import tpu as pltpu


# ----------------------------------------------------------------------------
# Fused kernel: all LSTM layers + relu->fc_1->relu->fc head, one invocation.
# ----------------------------------------------------------------------------
def fused_mylstm_kernel(*refs, num_layers, bp, seq_len, hidden):
    L, BP, S, H = num_layers, bp, seq_len, hidden
    n_gx = min(L - 1, 2) if L > 1 else 0

    x_ref = refs[0]                                   # (S*BP, I) time-major rows
    lstm_refs = refs[1:1 + 3 * L]                     # (wih_t, whh_t, bias) per layer
    w1_ref, b1_ref, w2_ref, b2_ref = refs[1 + 3 * L: 5 + 3 * L]
    out_ref = refs[5 + 3 * L]                         # (L*BP, C)
    gx_scratch = refs[6 + 3 * L: 6 + 3 * L + n_gx]    # VMEM (S*BP, 4H) f32 each

    # Cast all weights to bf16 once (native MXU operand format); biases f32.
    wih = [lstm_refs[3 * l + 0][...].astype(jnp.bfloat16) for l in range(L)]
    whh = [lstm_refs[3 * l + 1][...].astype(jnp.bfloat16) for l in range(L)]
    bias = [lstm_refs[3 * l + 2][...] for l in range(L)]          # (1, 4H) f32
    w1_bf = w1_ref[...].astype(jnp.bfloat16)
    w2_bf = w2_ref[...].astype(jnp.bfloat16)

    def gate_combine(gates, c_prev, first):
        # One full-(BP,4H)-vreg EUP pass covers i/f/o: sigmoid(x)=0.5*tanh(0.5x)+0.5
        sg = jnp.tanh(0.5 * gates)
        i_g = 0.5 * sg[:, 0 * H:1 * H] + 0.5
        o_g = 0.5 * sg[:, 3 * H:4 * H] + 0.5
        g_g = jnp.tanh(gates[:, 2 * H:3 * H])         # second (quarter-vreg) EUP pass
        ig = i_g * g_g
        if first:                                     # c_prev == 0: drop f*c term
            c = ig
        else:
            f_g = 0.5 * sg[:, 1 * H:2 * H] + 0.5
            c = f_g * c_prev + ig
        h = o_g * jnp.tanh(c)
        return h, c

    # Layer-0 input projection hoisted out of the recurrence: one big MXU
    # matmul over all timesteps (M = S*BP rows).
    x_bf = x_ref[...].astype(jnp.bfloat16)
    gx0 = jnp.dot(x_bf, wih[0], preferred_element_type=jnp.float32) + bias[0]

    hn_list = []
    for l in range(L):
        write_next = l < L - 1
        gx_in_ref = gx_scratch[(l - 1) % n_gx] if l >= 1 else None
        gx_out_ref = gx_scratch[l % n_gx] if write_next else None

        h = None
        c = None
        for t in range(S):                            # fully unrolled (static S)
            rows = slice(t * BP, (t + 1) * BP)        # aligned 8-row block
            g_t = gx0[rows, :] if l == 0 else gx_in_ref[rows, :]
            if t == 0:
                gates = g_t                           # h0 = 0: skip h @ W_hh
            else:
                gates = g_t + jnp.dot(h.astype(jnp.bfloat16), whh[l],
                                      preferred_element_type=jnp.float32)
            h, c = gate_combine(gates, c, first=(t == 0))
            if write_next:
                # Fused next-layer input projection, streamed into VMEM scratch
                # (hidden under this layer's per-step latency; MXU has slack).
                gx_out_ref[rows, :] = jnp.dot(
                    h.astype(jnp.bfloat16), wih[l + 1],
                    preferred_element_type=jnp.float32) + bias[l + 1]
        hn_list.append(h)                             # (BP, H) final hidden state

    # hn.view(-1, H): layer-major stack of per-layer final hidden states.
    # Padded batch rows carry harmless garbage; the wrapper slices them off.
    hn = jnp.concatenate(hn_list, axis=0)             # (L*BP, H), 8-row aligned
    z = jnp.maximum(hn, 0.0)                          # relu
    z = jnp.dot(z.astype(jnp.bfloat16), w1_bf,
                preferred_element_type=jnp.float32) + b1_ref[...]
    z = jnp.maximum(z, 0.0)                           # relu (dropout = identity, eval)
    z = jnp.dot(z.astype(jnp.bfloat16), w2_bf,
                preferred_element_type=jnp.float32) + b2_ref[...]
    out_ref[...] = z.astype(out_ref.dtype)


# ----------------------------------------------------------------------------
# Wrapper: single pallas_call, everything resident in VMEM.
# ----------------------------------------------------------------------------
def my_lstm_forward(x, params):
    """x: (B, S, input_size) -> (num_layers * B, num_classes)."""
    B, S, I = x.shape
    L = len(params["lstm"])
    H = params["lstm"][0][1].shape[0]
    C = params["w2_t"].shape[1]
    BP = max(8, ((B + 7) // 8) * 8)                   # pad batch to sublane tile

    # Time-major + batch-padded so timestep t is the aligned rows [t*BP:(t+1)*BP].
    x_tm = jnp.transpose(x, (1, 0, 2))                # (S, B, I)
    x_pad = jnp.pad(x_tm, ((0, 0), (0, BP - B), (0, 0)))
    x_flat = x_pad.reshape(S * BP, I).astype(jnp.float32)

    args = [x_flat]
    for (wih_t, whh_t, bias) in params["lstm"]:
        args += [wih_t, whh_t, bias.reshape(1, -1)]
    args += [params["w1_t"], params["b1"].reshape(1, -1),
             params["w2_t"], params["b2"].reshape(1, -1)]

    n_gx = min(L - 1, 2) if L > 1 else 0
    kernel = functools.partial(fused_mylstm_kernel, num_layers=L, bp=BP,
                               seq_len=S, hidden=H)
    vmem = pl.BlockSpec(memory_space=pltpu.MemorySpace.VMEM)
    out_pad = pl.pallas_call(
        kernel,
        out_shape=jax.ShapeDtypeStruct((L * BP, C), jnp.float32),
        in_specs=[vmem] * len(args),
        out_specs=vmem,
        scratch_shapes=[pltpu.VMEM((S * BP, 4 * H), jnp.float32)] * n_gx,
        compiler_params=pltpu.CompilerParams(vmem_limit_bytes=32 * 1024 * 1024),
    )(*args)
    # Drop padded batch rows: (L*BP, C) -> layer-major (L*B, C).
    return out_pad.reshape(L, BP, C)[:, :B, :].reshape(L * B, C)


# ----------------------------------------------------------------------------
# Pure-JAX references (f32 and bf16-matmul-matched) and parameter init.
# ----------------------------------------------------------------------------
def my_lstm_reference(x, params, matmul_dtype=None):
    B, S, _ = x.shape
    H = params["lstm"][0][1].shape[0]

    def mm(a, b):
        if matmul_dtype is not None:
            a = a.astype(matmul_dtype)
            b = b.astype(matmul_dtype)
        return jnp.dot(a, b, preferred_element_type=jnp.float32,
                       precision=jax.lax.Precision.HIGHEST)

    layer_in = x.astype(jnp.float32)
    hn_list = []
    for (wih_t, whh_t, bias) in params["lstm"]:
        h = jnp.zeros((B, H), jnp.float32)
        c = jnp.zeros((B, H), jnp.float32)
        outs = []
        for t in range(S):
            gates = mm(layer_in[:, t, :], wih_t) + mm(h, whh_t) + bias
            i_g = jax.nn.sigmoid(gates[:, 0 * H:1 * H])
            f_g = jax.nn.sigmoid(gates[:, 1 * H:2 * H])
            g_g = jnp.tanh(gates[:, 2 * H:3 * H])
            o_g = jax.nn.sigmoid(gates[:, 3 * H:4 * H])
            c = f_g * c + i_g * g_g
            h = o_g * jnp.tanh(c)
            outs.append(h)
        layer_in = jnp.stack(outs, axis=1)
        hn_list.append(h)
    hn = jnp.concatenate(hn_list, axis=0)
    z = jnp.maximum(hn, 0.0)
    z = mm(z, params["w1_t"]) + params["b1"]
    z = jnp.maximum(z, 0.0)
    z = mm(z, params["w2_t"]) + params["b2"]
    return z


def init_params(key, input_size, hidden_size, num_layers, num_classes):
    params = {"lstm": []}
    k = key
    bound = 1.0 / jnp.sqrt(hidden_size)
    in_sz = input_size
    for _ in range(num_layers):
        k, k1, k2, k3, k4 = jax.random.split(k, 5)
        w_ih = jax.random.uniform(k1, (4 * hidden_size, in_sz),
                                  minval=-bound, maxval=bound)
        w_hh = jax.random.uniform(k2, (4 * hidden_size, hidden_size),
                                  minval=-bound, maxval=bound)
        b_ih = jax.random.uniform(k3, (4 * hidden_size,),
                                  minval=-bound, maxval=bound)
        b_hh = jax.random.uniform(k4, (4 * hidden_size,),
                                  minval=-bound, maxval=bound)
        params["lstm"].append((w_ih.T, w_hh.T, b_ih + b_hh))
        in_sz = hidden_size

    k, k1, k2, k3, k4 = jax.random.split(k, 5)
    b1_bound = 1.0 / jnp.sqrt(hidden_size)
    w1 = jax.random.uniform(k1, (128, hidden_size), minval=-b1_bound, maxval=b1_bound)
    b1 = jax.random.uniform(k2, (128,), minval=-b1_bound, maxval=b1_bound)
    b2_bound = 1.0 / jnp.sqrt(128.0)
    w2 = jax.random.uniform(k3, (num_classes, 128), minval=-b2_bound, maxval=b2_bound)
    b2 = jax.random.uniform(k4, (num_classes,), minval=-b2_bound, maxval=b2_bound)
    params.update({"w1_t": w1.T, "b1": b1, "w2_t": w2.T, "b2": b2})
    return params


if __name__ == "__main__":
    batch, seq_length = 2, 8
    input_size, hidden_size = 16, 32
    num_layers, num_classes = 2, 4

    key = jax.random.PRNGKey(0)
    kx, kp = jax.random.split(key)
    x = jax.random.normal(kx, (batch, seq_length, input_size), dtype=jnp.float32)
    params = init_params(kp, input_size, hidden_size, num_layers, num_classes)

    out = jax.jit(my_lstm_forward)(x, params)
    jax.block_until_ready(out)
    assert out.shape == (num_layers * batch, num_classes)

    # Tight check vs a reference using the same bf16 matmul operands.
    ref_bf16 = my_lstm_reference(x, params, matmul_dtype=jnp.bfloat16)
    assert jnp.allclose(out, ref_bf16, atol=5e-3, rtol=5e-3), (
        f"bf16-matched mismatch: max abs diff = {jnp.max(jnp.abs(out - ref_bf16))}")

    # Loose sanity check vs the full-precision f32 reference (bf16 rounding
    # compounds over S steps and both layers).
    ref_f32 = my_lstm_reference(x, params)
    assert jnp.allclose(out, ref_f32, atol=5e-2, rtol=5e-2), (
        f"f32 mismatch: max abs diff = {jnp.max(jnp.abs(out - ref_f32))}")

    print("KERNEL_OK")
</pallas_src>

<mosaic_0001>
module attributes {stable_mosaic.version = 11 : i64} {
  func.func @fused_mylstm_kernel(%arg0: memref<64x16xf32, #tpu.memory_space<vmem>>, %arg1: memref<16x128xf32, #tpu.memory_space<vmem>>, %arg2: memref<32x128xf32, #tpu.memory_space<vmem>>, %arg3: memref<1x128xf32, #tpu.memory_space<vmem>>, %arg4: memref<32x128xf32, #tpu.memory_space<vmem>>, %arg5: memref<32x128xf32, #tpu.memory_space<vmem>>, %arg6: memref<1x128xf32, #tpu.memory_space<vmem>>, %arg7: memref<32x128xf32, #tpu.memory_space<vmem>>, %arg8: memref<1x128xf32, #tpu.memory_space<vmem>>, %arg9: memref<128x4xf32, #tpu.memory_space<vmem>>, %arg10: memref<1x4xf32, #tpu.memory_space<vmem>>, %arg11: memref<16x4xf32, #tpu.memory_space<vmem>>, %arg12: memref<64x128xf32, #tpu.memory_space<vmem>>) attributes {dimension_semantics = [], scalar_prefetch = 0 : i64, scratch_operands = 1 : i64, tpu.core_type = #tpu.core_type<tc>} {
    %c0 = arith.constant 0 : index
    %c0_0 = arith.constant 0 : index
    %0 = vector.load %arg1[%c0, %c0_0] : memref<16x128xf32, #tpu.memory_space<vmem>>, vector<16x128xf32>
    %1 = arith.truncf %0 : vector<16x128xf32> to vector<16x128xbf16>
    %c0_1 = arith.constant 0 : index
    %c0_2 = arith.constant 0 : index
    %2 = vector.load %arg4[%c0_1, %c0_2] : memref<32x128xf32, #tpu.memory_space<vmem>>, vector<32x128xf32>
    %3 = arith.truncf %2 : vector<32x128xf32> to vector<32x128xbf16>
    %c0_3 = arith.constant 0 : index
    %c0_4 = arith.constant 0 : index
    %4 = vector.load %arg2[%c0_3, %c0_4] : memref<32x128xf32, #tpu.memory_space<vmem>>, vector<32x128xf32>
    %5 = arith.truncf %4 : vector<32x128xf32> to vector<32x128xbf16>
    %c0_5 = arith.constant 0 : index
    %c0_6 = arith.constant 0 : index
    %6 = vector.load %arg5[%c0_5, %c0_6] : memref<32x128xf32, #tpu.memory_space<vmem>>, vector<32x128xf32>
    %7 = arith.truncf %6 : vector<32x128xf32> to vector<32x128xbf16>
    %c0_7 = arith.constant 0 : index
    %c0_8 = arith.constant 0 : index
    %8 = vector.load %arg3[%c0_7, %c0_8] : memref<1x128xf32, #tpu.memory_space<vmem>>, vector<1x128xf32>
    %c0_9 = arith.constant 0 : index
    %c0_10 = arith.constant 0 : index
    %9 = vector.load %arg6[%c0_9, %c0_10] : memref<1x128xf32, #tpu.memory_space<vmem>>, vector<1x128xf32>
    %c0_11 = arith.constant 0 : index
    %c0_12 = arith.constant 0 : index
    %10 = vector.load %arg7[%c0_11, %c0_12] : memref<32x128xf32, #tpu.memory_space<vmem>>, vector<32x128xf32>
    %11 = arith.truncf %10 : vector<32x128xf32> to vector<32x128xbf16>
    %c0_13 = arith.constant 0 : index
    %c0_14 = arith.constant 0 : index
    %12 = vector.load %arg9[%c0_13, %c0_14] : memref<128x4xf32, #tpu.memory_space<vmem>>, vector<128x4xf32>
    %13 = arith.truncf %12 : vector<128x4xf32> to vector<128x4xbf16>
    %c0_15 = arith.constant 0 : index
    %c0_16 = arith.constant 0 : index
    %14 = vector.load %arg0[%c0_15, %c0_16] : memref<64x16xf32, #tpu.memory_space<vmem>>, vector<64x16xf32>
    %15 = arith.truncf %14 : vector<64x16xf32> to vector<64x16xbf16>
    %cst = arith.constant dense<0.000000e+00> : vector<64x128xf32>
    %16 = tpu.matmul %15, %1, %cst {dimension_numbers = #tpu.dot_dimension_numbers<[1], [0], [0], [1], [0, 0, 1, 1], [], []>} : vector<64x16xbf16>, vector<16x128xbf16>, vector<64x128xf32> -> vector<64x128xf32>
    %17 = vector.broadcast %8 : vector<1x128xf32> to vector<64x128xf32>
    %18 = arith.addf %16, %17 : vector<64x128xf32>
    %19 = vector.extract_strided_slice %18 {offsets = [0, 0], sizes = [8, 128], strides = [1, 1]} : vector<64x128xf32> to vector<8x128xf32>
    %cst_17 = arith.constant 5.000000e-01 : f32
    %20 = vector.broadcast %cst_17 : f32 to vector<8x128xf32>
    %21 = arith.mulf %20, %19 : vector<8x128xf32>
    %22 = math.tanh %21 : vector<8x128xf32>
    %23 = vector.extract_strided_slice %22 {offsets = [0, 0], sizes = [8, 32], strides = [1, 1]} : vector<8x128xf32> to vector<8x32xf32>
    %cst_18 = arith.constant 5.000000e-01 : f32
    %24 = vector.broadcast %cst_18 : f32 to vector<8x32xf32>
    %25 = arith.mulf %24, %23 : vector<8x32xf32>
    %cst_19 = arith.constant 5.000000e-01 : f32
    %26 = vector.broadcast %cst_19 : f32 to vector<8x32xf32>
    %27 = arith.addf %25, %26 : vector<8x32xf32>
    %28 = vector.extract_strided_slice %22 {offsets = [0, 96], sizes = [8, 32], strides = [1, 1]} : vector<8x128xf32> to vector<8x32xf32>
    %cst_20 = arith.constant 5.000000e-01 : f32
    %29 = vector.broadcast %cst_20 : f32 to vector<8x32xf32>
    %30 = arith.mulf %29, %28 : vector<8x32xf32>
    %cst_21 = arith.constant 5.000000e-01 : f32
    %31 = vector.broadcast %cst_21 : f32 to vector<8x32xf32>
    %32 = arith.addf %30, %31 : vector<8x32xf32>
    %33 = vector.extract_strided_slice %19 {offsets = [0, 64], sizes = [8, 32], strides = [1, 1]} : vector<8x128xf32> to vector<8x32xf32>
    %34 = math.tanh %33 : vector<8x32xf32>
    %35 = arith.mulf %27, %34 : vector<8x32xf32>
    %36 = math.tanh %35 : vector<8x32xf32>
    %37 = arith.mulf %32, %36 : vector<8x32xf32>
    %38 = arith.truncf %37 : vector<8x32xf32> to vector<8x32xbf16>
    %cst_22 = arith.constant dense<0.000000e+00> : vector<8x128xf32>
    %39 = tpu.matmul %38, %3, %cst_22 {dimension_numbers = #tpu.dot_dimension_numbers<[1], [0], [0], [1], [0, 0, 1, 1], [], []>} : vector<8x32xbf16>, vector<32x128xbf16>, vector<8x128xf32> -> vector<8x128xf32>
    %40 = vector.broadcast %9 : vector<1x128xf32> to vector<8x128xf32>
    %41 = arith.addf %39, %40 : vector<8x128xf32>
    %c0_23 = arith.constant 0 : index
    %c0_24 = arith.constant 0 : index
    %42 = vector.load %arg12[%c0_23, %c0_24] : memref<64x128xf32, #tpu.memory_space<vmem>>, vector<8x128xf32>
    tpu.vector_store %arg12[%c0_23, %c0_24], %41 {strides = array<i32>} : memref<64x128xf32, #tpu.memory_space<vmem>>, vector<8x128xf32>,
    %43 = vector.extract_strided_slice %18 {offsets = [8, 0], sizes = [8, 128], strides = [1, 1]} : vector<64x128xf32> to vector<8x128xf32>
    %44 = arith.truncf %37 : vector<8x32xf32> to vector<8x32xbf16>
    %cst_25 = arith.constant dense<0.000000e+00> : vector<8x128xf32>
    %45 = tpu.matmul %44, %5, %cst_25 {dimension_numbers = #tpu.dot_dimension_numbers<[1], [0], [0], [1], [0, 0, 1, 1], [], []>} : vector<8x32xbf16>, vector<32x128xbf16>, vector<8x128xf32> -> vector<8x128xf32>
    %46 = arith.addf %43, %45 : vector<8x128xf32>
    %cst_26 = arith.constant 5.000000e-01 : f32
    %47 = vector.broadcast %cst_26 : f32 to vector<8x128xf32>
    %48 = arith.mulf %47, %46 : vector<8x128xf32>
    %49 = math.tanh %48 : vector<8x128xf32>
    %50 = vector.extract_strided_slice %49 {offsets = [0, 0], sizes = [8, 32], strides = [1, 1]} : vector<8x128xf32> to vector<8x32xf32>
    %cst_27 = arith.constant 5.000000e-01 : f32
    %51 = vector.broadcast %cst_27 : f32 to vector<8x32xf32>
    %52 = arith.mulf %51, %50 : vector<8x32xf32>
    %cst_28 = arith.constant 5.000000e-01 : f32
    %53 = vector.broadcast %cst_28 : f32 to vector<8x32xf32>
    %54 = arith.addf %52, %53 : vector<8x32xf32>
    %55 = vector.extract_strided_slice %49 {offsets = [0, 96], sizes = [8, 32], strides = [1, 1]} : vector<8x128xf32> to vector<8x32xf32>
    %cst_29 = arith.constant 5.000000e-01 : f32
    %56 = vector.broadcast %cst_29 : f32 to vector<8x32xf32>
    %57 = arith.mulf %56, %55 : vector<8x32xf32>
    %cst_30 = arith.constant 5.000000e-01 : f32
    %58 = vector.broadcast %cst_30 : f32 to vector<8x32xf32>
    %59 = arith.addf %57, %58 : vector<8x32xf32>
    %60 = vector.extract_strided_slice %46 {offsets = [0, 64], sizes = [8, 32], strides = [1, 1]} : vector<8x128xf32> to vector<8x32xf32>
    %61 = math.tanh %60 : vector<8x32xf32>
    %62 = arith.mulf %54, %61 : vector<8x32xf32>
    %63 = vector.extract_strided_slice %49 {offsets = [0, 32], sizes = [8, 32], strides = [1, 1]} : vector<8x128xf32> to vector<8x32xf32>
    %cst_31 = arith.constant 5.000000e-01 : f32
    %64 = vector.broadcast %cst_31 : f32 to vector<8x32xf32>
    %65 = arith.mulf %64, %63 : vector<8x32xf32>
    %cst_32 = arith.constant 5.000000e-01 : f32
    %66 = vector.broadcast %cst_32 : f32 to vector<8x32xf32>
    %67 = arith.addf %65, %66 : vector<8x32xf32>
    %68 = arith.mulf %67, %35 : vector<8x32xf32>
    %69 = arith.addf %68, %62 : vector<8x32xf32>
    %70 = math.tanh %69 : vector<8x32xf32>
    %71 = arith.mulf %59, %70 : vector<8x32xf32>
    %72 = arith.truncf %71 : vector<8x32xf32> to vector<8x32xbf16>
    %cst_33 = arith.constant dense<0.000000e+00> : vector<8x128xf32>
    %73 = tpu.matmul %72, %3, %cst_33 {dimension_numbers = #tpu.dot_dimension_numbers<[1], [0], [0], [1], [0, 0, 1, 1], [], []>} : vector<8x32xbf16>, vector<32x128xbf16>, vector<8x128xf32> -> vector<8x128xf32>
    %74 = vector.broadcast %9 : vector<1x128xf32> to vector<8x128xf32>
    %75 = arith.addf %73, %74 : vector<8x128xf32>
    %c8 = arith.constant 8 : index
    %c0_34 = arith.constant 0 : index
    %76 = vector.load %arg12[%c8, %c0_34] : memref<64x128xf32, #tpu.memory_space<vmem>>, vector<8x128xf32>
    tpu.vector_store %arg12[%c8, %c0_34], %75 {strides = array<i32>} : memref<64x128xf32, #tpu.memory_space<vmem>>, vector<8x128xf32>,
    %77 = vector.extract_strided_slice %18 {offsets = [16, 0], sizes = [8, 128], strides = [1, 1]} : vector<64x128xf32> to vector<8x128xf32>
    %78 = arith.truncf %71 : vector<8x32xf32> to vector<8x32xbf16>
    %cst_35 = arith.constant dense<0.000000e+00> : vector<8x128xf32>
    %79 = tpu.matmul %78, %5, %cst_35 {dimension_numbers = #tpu.dot_dimension_numbers<[1], [0], [0], [1], [0, 0, 1, 1], [], []>} : vector<8x32xbf16>, vector<32x128xbf16>, vector<8x128xf32> -> vector<8x128xf32>
    %80 = arith.addf %77, %79 : vector<8x128xf32>
    %cst_36 = arith.constant 5.000000e-01 : f32
    %81 = vector.broadcast %cst_36 : f32 to vector<8x128xf32>
    %82 = arith.mulf %81, %80 : vector<8x128xf32>
    %83 = math.tanh %82 : vector<8x128xf32>
    %84 = vector.extract_strided_slice %83 {offsets = [0, 0], sizes = [8, 32], strides = [1, 1]} : vector<8x128xf32> to vector<8x32xf32>
    %cst_37 = arith.constant 5.000000e-01 : f32
    %85 = vector.broadcast %cst_37 : f32 to vector<8x32xf32>
    %86 = arith.mulf %85, %84 : vector<8x32xf32>
    %cst_38 = arith.constant 5.000000e-01 : f32
    %87 = vector.broadcast %cst_38 : f32 to vector<8x32xf32>
    %88 = arith.addf %86, %87 : vector<8x32xf32>
    %89 = vector.extract_strided_slice %83 {offsets = [0, 96], sizes = [8, 32], strides = [1, 1]} : vector<8x128xf32> to vector<8x32xf32>
    %cst_39 = arith.constant 5.000000e-01 : f32
    %90 = vector.broadcast %cst_39 : f32 to vector<8x32xf32>
    %91 = arith.mulf %90, %89 : vector<8x32xf32>
    %cst_40 = arith.constant 5.000000e-01 : f32
    %92 = vector.broadcast %cst_40 : f32 to vector<8x32xf32>
    %93 = arith.addf %91, %92 : vector<8x32xf32>
    %94 = vector.extract_strided_slice %80 {offsets = [0, 64], sizes = [8, 32], strides = [1, 1]} : vector<8x128xf32> to vector<8x32xf32>
    %95 = math.tanh %94 : vector<8x32xf32>
    %96 = arith.mulf %88, %95 : vector<8x32xf32>
    %97 = vector.extract_strided_slice %83 {offsets = [0, 32], sizes = [8, 32], strides = [1, 1]} : vector<8x128xf32> to vector<8x32xf32>
    %cst_41 = arith.constant 5.000000e-01 : f32
    %98 = vector.broadcast %cst_41 : f32 to vector<8x32xf32>
    %99 = arith.mulf %98, %97 : vector<8x32xf32>
    %cst_42 = arith.constant 5.000000e-01 : f32
    %100 = vector.broadcast %cst_42 : f32 to vector<8x32xf32>
    %101 = arith.addf %99, %100 : vector<8x32xf32>
    %102 = arith.mulf %101, %69 : vector<8x32xf32>
    %103 = arith.addf %102, %96 : vector<8x32xf32>
    %104 = math.tanh %103 : vector<8x32xf32>
    %105 = arith.mulf %93, %104 : vector<8x32xf32>
    %106 = arith.truncf %105 : vector<8x32xf32> to vector<8x32xbf16>
    %cst_43 = arith.constant dense<0.000000e+00> : vector<8x128xf32>
    %107 = tpu.matmul %106, %3, %cst_43 {dimension_numbers = #tpu.dot_dimension_numbers<[1], [0], [0], [1], [0, 0, 1, 1], [], []>} : vector<8x32xbf16>, vector<32x128xbf16>, vector<8x128xf32> -> vector<8x128xf32>
    %108 = vector.broadcast %9 : vector<1x128xf32> to vector<8x128xf32>
    %109 = arith.addf %107, %108 : vector<8x128xf32>
    %c16 = arith.constant 16 : index
    %c0_44 = arith.constant 0 : index
    %110 = vector.load %arg12[%c16, %c0_44] : memref<64x128xf32, #tpu.memory_space<vmem>>, vector<8x128xf32>
    tpu.vector_store %arg12[%c16, %c0_44], %109 {strides = array<i32>} : memref<64x128xf32, #tpu.memory_space<vmem>>, vector<8x128xf32>,
    %111 = vector.extract_strided_slice %18 {offsets = [24, 0], sizes = [8, 128], strides = [1, 1]} : vector<64x128xf32> to vector<8x128xf32>
    %112 = arith.truncf %105 : vector<8x32xf32> to vector<8x32xbf16>
    %cst_45 = arith.constant dense<0.000000e+00> : vector<8x128xf32>
    %113 = tpu.matmul %112, %5, %cst_45 {dimension_numbers = #tpu.dot_dimension_numbers<[1], [0], [0], [1], [0, 0, 1, 1], [], []>} : vector<8x32xbf16>, vector<32x128xbf16>, vector<8x128xf32> -> vector<8x128xf32>
    %114 = arith.addf %111, %113 : vector<8x128xf32>
    %cst_46 = arith.constant 5.000000e-01 : f32
    %115 = vector.broadcast %cst_46 : f32 to vector<8x128xf32>
    %116 = arith.mulf %115, %114 : vector<8x128xf32>
    %117 = math.tanh %116 : vector<8x128xf32>
    %118 = vector.extract_strided_slice %117 {offsets = [0, 0], sizes = [8, 32], strides = [1, 1]} : vector<8x128xf32> to vector<8x32xf32>
    %cst_47 = arith.constant 5.000000e-01 : f32
    %119 = vector.broadcast %cst_47 : f32 to vector<8x32xf32>
    %120 = arith.mulf %119, %118 : vector<8x32xf32>
    %cst_48 = arith.constant 5.000000e-01 : f32
    %121 = vector.broadcast %cst_48 : f32 to vector<8x32xf32>
    %122 = arith.addf %120, %121 : vector<8x32xf32>
    %123 = vector.extract_strided_slice %117 {offsets = [0, 96], sizes = [8, 32], strides = [1, 1]} : vector<8x128xf32> to vector<8x32xf32>
    %cst_49 = arith.constant 5.000000e-01 : f32
    %124 = vector.broadcast %cst_49 : f32 to vector<8x32xf32>
    %125 = arith.mulf %124, %123 : vector<8x32xf32>
    %cst_50 = arith.constant 5.000000e-01 : f32
    %126 = vector.broadcast %cst_50 : f32 to vector<8x32xf32>
    %127 = arith.addf %125, %126 : vector<8x32xf32>
    %128 = vector.extract_strided_slice %114 {offsets = [0, 64], sizes = [8, 32], strides = [1, 1]} : vector<8x128xf32> to vector<8x32xf32>
    %129 = math.tanh %128 : vector<8x32xf32>
    %130 = arith.mulf %122, %129 : vector<8x32xf32>
    %131 = vector.extract_strided_slice %117 {offsets = [0, 32], sizes = [8, 32], strides = [1, 1]} : vector<8x128xf32> to vector<8x32xf32>
    %cst_51 = arith.constant 5.000000e-01 : f32
    %132 = vector.broadcast %cst_51 : f32 to vector<8x32xf32>
    %133 = arith.mulf %132, %131 : vector<8x32xf32>
    %cst_52 = arith.constant 5.000000e-01 : f32
    %134 = vector.broadcast %cst_52 : f32 to vector<8x32xf32>
    %135 = arith.addf %133, %134 : vector<8x32xf32>
    %136 = arith.mulf %135, %103 : vector<8x32xf32>
    %137 = arith.addf %136, %130 : vector<8x32xf32>
    %138 = math.tanh %137 : vector<8x32xf32>
    %139 = arith.mulf %127, %138 : vector<8x32xf32>
    %140 = arith.truncf %139 : vector<8x32xf32> to vector<8x32xbf16>
    %cst_53 = arith.constant dense<0.000000e+00> : vector<8x128xf32>
    %141 = tpu.matmul %140, %3, %cst_53 {dimension_numbers = #tpu.dot_dimension_numbers<[1], [0], [0], [1], [0, 0, 1, 1], [], []>} : vector<8x32xbf16>, vector<32x128xbf16>, vector<8x128xf32> -> vector<8x128xf32>
    %142 = vector.broadcast %9 : vector<1x128xf32> to vector<8x128xf32>
    %143 = arith.addf %141, %142 : vector<8x128xf32>
    %c24 = arith.constant 24 : index
    %c0_54 = arith.constant 0 : index
    %144 = vector.load %arg12[%c24, %c0_54] : memref<64x128xf32, #tpu.memory_space<vmem>>, vector<8x128xf32>
    tpu.vector_store %arg12[%c24, %c0_54], %143 {strides = array<i32>} : memref<64x128xf32, #tpu.memory_space<vmem>>, vector<8x128xf32>,
    %145 = vector.extract_strided_slice %18 {offsets = [32, 0], sizes = [8, 128], strides = [1, 1]} : vector<64x128xf32> to vector<8x128xf32>
    %146 = arith.truncf %139 : vector<8x32xf32> to vector<8x32xbf16>
    %cst_55 = arith.constant dense<0.000000e+00> : vector<8x128xf32>
    %147 = tpu.matmul %146, %5, %cst_55 {dimension_numbers = #tpu.dot_dimension_numbers<[1], [0], [0], [1], [0, 0, 1, 1], [], []>} : vector<8x32xbf16>, vector<32x128xbf16>, vector<8x128xf32> -> vector<8x128xf32>
    %148 = arith.addf %145, %147 : vector<8x128xf32>
    %cst_56 = arith.constant 5.000000e-01 : f32
    %149 = vector.broadcast %cst_56 : f32 to vector<8x128xf32>
    %150 = arith.mulf %149, %148 : vector<8x128xf32>
    %151 = math.tanh %150 : vector<8x128xf32>
    %152 = vector.extract_strided_slice %151 {offsets = [0, 0], sizes = [8, 32], strides = [1, 1]} : vector<8x128xf32> to vector<8x32xf32>
    %cst_57 = arith.constant 5.000000e-01 : f32
    %153 = vector.broadcast %cst_57 : f32 to vector<8x32xf32>
    %154 = arith.mulf %153, %152 : vector<8x32xf32>
    %cst_58 = arith.constant 5.000000e-01 : f32
    %155 = vector.broadcast %cst_58 : f32 to vector<8x32xf32>
    %156 = arith.addf %154, %155 : vector<8x32xf32>
    %157 = vector.extract_strided_slice %151 {offsets = [0, 96], sizes = [8, 32], strides = [1, 1]} : vector<8x128xf32> to vector<8x32xf32>
    %cst_59 = arith.constant 5.000000e-01 : f32
    %158 = vector.broadcast %cst_59 : f32 to vector<8x32xf32>
    %159 = arith.mulf %158, %157 : vector<8x32xf32>
    %cst_60 = arith.constant 5.000000e-01 : f32
    %160 = vector.broadcast %cst_60 : f32 to vector<8x32xf32>
    %161 = arith.addf %159, %160 : vector<8x32xf32>
    %162 = vector.extract_strided_slice %148 {offsets = [0, 64], sizes = [8, 32], strides = [1, 1]} : vector<8x128xf32> to vector<8x32xf32>
    %163 = math.tanh %162 : vector<8x32xf32>
    %164 = arith.mulf %156, %163 : vector<8x32xf32>
    %165 = vector.extract_strided_slice %151 {offsets = [0, 32], sizes = [8, 32], strides = [1, 1]} : vector<8x128xf32> to vector<8x32xf32>
    %cst_61 = arith.constant 5.000000e-01 : f32
    %166 = vector.broadcast %cst_61 : f32 to vector<8x32xf32>
    %167 = arith.mulf %166, %165 : vector<8x32xf32>
    %cst_62 = arith.constant 5.000000e-01 : f32
    %168 = vector.broadcast %cst_62 : f32 to vector<8x32xf32>
    %169 = arith.addf %167, %168 : vector<8x32xf32>
    %170 = arith.mulf %169, %137 : vector<8x32xf32>
    %171 = arith.addf %170, %164 : vector<8x32xf32>
    %172 = math.tanh %171 : vector<8x32xf32>
    %173 = arith.mulf %161, %172 : vector<8x32xf32>
    %174 = arith.truncf %173 : vector<8x32xf32> to vector<8x32xbf16>
    %cst_63 = arith.constant dense<0.000000e+00> : vector<8x128xf32>
    %175 = tpu.matmul %174, %3, %cst_63 {dimension_numbers = #tpu.dot_dimension_numbers<[1], [0], [0], [1], [0, 0, 1, 1], [], []>} : vector<8x32xbf16>, vector<32x128xbf16>, vector<8x128xf32> -> vector<8x128xf32>
    %176 = vector.broadcast %9 : vector<1x128xf32> to vector<8x128xf32>
    %177 = arith.addf %175, %176 : vector<8x128xf32>
    %c32 = arith.constant 32 : index
    %c0_64 = arith.constant 0 : index
    %178 = vector.load %arg12[%c32, %c0_64] : memref<64x128xf32, #tpu.memory_space<vmem>>, vector<8x128xf32>
    tpu.vector_store %arg12[%c32, %c0_64], %177 {strides = array<i32>} : memref<64x128xf32, #tpu.memory_space<vmem>>, vector<8x128xf32>,
    %179 = vector.extract_strided_slice %18 {offsets = [40, 0], sizes = [8, 128], strides = [1, 1]} : vector<64x128xf32> to vector<8x128xf32>
    %180 = arith.truncf %173 : vector<8x32xf32> to vector<8x32xbf16>
    %cst_65 = arith.constant dense<0.000000e+00> : vector<8x128xf32>
    %181 = tpu.matmul %180, %5, %cst_65 {dimension_numbers = #tpu.dot_dimension_numbers<[1], [0], [0], [1], [0, 0, 1, 1], [], []>} : vector<8x32xbf16>, vector<32x128xbf16>, vector<8x128xf32> -> vector<8x128xf32>
    %182 = arith.addf %179, %181 : vector<8x128xf32>
    %cst_66 = arith.constant 5.000000e-01 : f32
    %183 = vector.broadcast %cst_66 : f32 to vector<8x128xf32>
    %184 = arith.mulf %183, %182 : vector<8x128xf32>
    %185 = math.tanh %184 : vector<8x128xf32>
    %186 = vector.extract_strided_slice %185 {offsets = [0, 0], sizes = [8, 32], strides = [1, 1]} : vector<8x128xf32> to vector<8x32xf32>
    %cst_67 = arith.constant 5.000000e-01 : f32
    %187 = vector.broadcast %cst_67 : f32 to vector<8x32xf32>
    %188 = arith.mulf %187, %186 : vector<8x32xf32>
    %cst_68 = arith.constant 5.000000e-01 : f32
    %189 = vector.broadcast %cst_68 : f32 to vector<8x32xf32>
    %190 = arith.addf %188, %189 : vector<8x32xf32>
    %191 = vector.extract_strided_slice %185 {offsets = [0, 96], sizes = [8, 32], strides = [1, 1]} : vector<8x128xf32> to vector<8x32xf32>
    %cst_69 = arith.constant 5.000000e-01 : f32
    %192 = vector.broadcast %cst_69 : f32 to vector<8x32xf32>
    %193 = arith.mulf %192, %191 : vector<8x32xf32>
    %cst_70 = arith.constant 5.000000e-01 : f32
    %194 = vector.broadcast %cst_70 : f32 to vector<8x32xf32>
    %195 = arith.addf %193, %194 : vector<8x32xf32>
    %196 = vector.extract_strided_slice %182 {offsets = [0, 64], sizes = [8, 32], strides = [1, 1]} : vector<8x128xf32> to vector<8x32xf32>
    %197 = math.tanh %196 : vector<8x32xf32>
    %198 = arith.mulf %190, %197 : vector<8x32xf32>
    %199 = vector.extract_strided_slice %185 {offsets = [0, 32], sizes = [8, 32], strides = [1, 1]} : vector<8x128xf32> to vector<8x32xf32>
    %cst_71 = arith.constant 5.000000e-01 : f32
    %200 = vector.broadcast %cst_71 : f32 to vector<8x32xf32>
    %201 = arith.mulf %200, %199 : vector<8x32xf32>
    %cst_72 = arith.constant 5.000000e-01 : f32
    %202 = vector.broadcast %cst_72 : f32 to vector<8x32xf32>
    %203 = arith.addf %201, %202 : vector<8x32xf32>
    %204 = arith.mulf %203, %171 : vector<8x32xf32>
    %205 = arith.addf %204, %198 : vector<8x32xf32>
    %206 = math.tanh %205 : vector<8x32xf32>
    %207 = arith.mulf %195, %206 : vector<8x32xf32>
    %208 = arith.truncf %207 : vector<8x32xf32> to vector<8x32xbf16>
    %cst_73 = arith.constant dense<0.000000e+00> : vector<8x128xf32>
    %209 = tpu.matmul %208, %3, %cst_73 {dimension_numbers = #tpu.dot_dimension_numbers<[1], [0], [0], [1], [0, 0, 1, 1], [], []>} : vector<8x32xbf16>, vector<32x128xbf16>, vector<8x128xf32> -> vector<8x128xf32>
    %210 = vector.broadcast %9 : vector<1x128xf32> to vector<8x128xf32>
    %211 = arith.addf %209, %210 : vector<8x128xf32>
    %c40 = arith.constant 40 : index
    %c0_74 = arith.constant 0 : index
    %212 = vector.load %arg12[%c40, %c0_74] : memref<64x128xf32, #tpu.memory_space<vmem>>, vector<8x128xf32>
    tpu.vector_store %arg12[%c40, %c0_74], %211 {strides = array<i32>} : memref<64x128xf32, #tpu.memory_space<vmem>>, vector<8x128xf32>,
    %213 = vector.extract_strided_slice %18 {offsets = [48, 0], sizes = [8, 128], strides = [1, 1]} : vector<64x128xf32> to vector<8x128xf32>
    %214 = arith.truncf %207 : vector<8x32xf32> to vector<8x32xbf16>
    %cst_75 = arith.constant dense<0.000000e+00> : vector<8x128xf32>
    %215 = tpu.matmul %214, %5, %cst_75 {dimension_numbers = #tpu.dot_dimension_numbers<[1], [0], [0], [1], [0, 0, 1, 1], [], []>} : vector<8x32xbf16>, vector<32x128xbf16>, vector<8x128xf32> -> vector<8x128xf32>
    %216 = arith.addf %213, %215 : vector<8x128xf32>
    %cst_76 = arith.constant 5.000000e-01 : f32
    %217 = vector.broadcast %cst_76 : f32 to vector<8x128xf32>
    %218 = arith.mulf %217, %216 : vector<8x128xf32>
    %219 = math.tanh %218 : vector<8x128xf32>
    %220 = vector.extract_strided_slice %219 {offsets = [0, 0], sizes = [8, 32], strides = [1, 1]} : vector<8x128xf32> to vector<8x32xf32>
    %cst_77 = arith.constant 5.000000e-01 : f32
    %221 = vector.broadcast %cst_77 : f32 to vector<8x32xf32>
    %222 = arith.mulf %221, %220 : vector<8x32xf32>
    %cst_78 = arith.constant 5.000000e-01 : f32
    %223 = vector.broadcast %cst_78 : f32 to vector<8x32xf32>
    %224 = arith.addf %222, %223 : vector<8x32xf32>
    %225 = vector.extract_strided_slice %219 {offsets = [0, 96], sizes = [8, 32], strides = [1, 1]} : vector<8x128xf32> to vector<8x32xf32>
    %cst_79 = arith.constant 5.000000e-01 : f32
    %226 = vector.broadcast %cst_79 : f32 to vector<8x32xf32>
    %227 = arith.mulf %226, %225 : vector<8x32xf32>
    %cst_80 = arith.constant 5.000000e-01 : f32
    %228 = vector.broadcast %cst_80 : f32 to vector<8x32xf32>
    %229 = arith.addf %227, %228 : vector<8x32xf32>
    %230 = vector.extract_strided_slice %216 {offsets = [0, 64], sizes = [8, 32], strides = [1, 1]} : vector<8x128xf32> to vector<8x32xf32>
    %231 = math.tanh %230 : vector<8x32xf32>
    %232 = arith.mulf %224, %231 : vector<8x32xf32>
    %233 = vector.extract_strided_slice %219 {offsets = [0, 32], sizes = [8, 32], strides = [1, 1]} : vector<8x128xf32> to vector<8x32xf32>
    %cst_81 = arith.constant 5.000000e-01 : f32
    %234 = vector.broadcast %cst_81 : f32 to vector<8x32xf32>
    %235 = arith.mulf %234, %233 : vector<8x32xf32>
    %cst_82 = arith.constant 5.000000e-01 : f32
    %236 = vector.broadcast %cst_82 : f32 to vector<8x32xf32>
    %237 = arith.addf %235, %236 : vector<8x32xf32>
    %238 = arith.mulf %237, %205 : vector<8x32xf32>
    %239 = arith.addf %238, %232 : vector<8x32xf32>
    %240 = math.tanh %239 : vector<8x32xf32>
    %241 = arith.mulf %229, %240 : vector<8x32xf32>
    %242 = arith.truncf %241 : vector<8x32xf32> to vector<8x32xbf16>
    %cst_83 = arith.constant dense<0.000000e+00> : vector<8x128xf32>
    %243 = tpu.matmul %242, %3, %cst_83 {dimension_numbers = #tpu.dot_dimension_numbers<[1], [0], [0], [1], [0, 0, 1, 1], [], []>} : vector<8x32xbf16>, vector<32x128xbf16>, vector<8x128xf32> -> vector<8x128xf32>
    %244 = vector.broadcast %9 : vector<1x128xf32> to vector<8x128xf32>
    %245 = arith.addf %243, %244 : vector<8x128xf32>
    %c48 = arith.constant 48 : index
    %c0_84 = arith.constant 0 : index
    %246 = vector.load %arg12[%c48, %c0_84] : memref<64x128xf32, #tpu.memory_space<vmem>>, vector<8x128xf32>
    tpu.vector_store %arg12[%c48, %c0_84], %245 {strides = array<i32>} : memref<64x128xf32, #tpu.memory_space<vmem>>, vector<8x128xf32>,
    %247 = vector.extract_strided_slice %18 {offsets = [56, 0], sizes = [8, 128], strides = [1, 1]} : vector<64x128xf32> to vector<8x128xf32>
    %248 = arith.truncf %241 : vector<8x32xf32> to vector<8x32xbf16>
    %cst_85 = arith.constant dense<0.000000e+00> : vector<8x128xf32>
    %249 = tpu.matmul %248, %5, %cst_85 {dimension_numbers = #tpu.dot_dimension_numbers<[1], [0], [0], [1], [0, 0, 1, 1], [], []>} : vector<8x32xbf16>, vector<32x128xbf16>, vector<8x128xf32> -> vector<8x128xf32>
    %250 = arith.addf %247, %249 : vector<8x128xf32>
    %cst_86 = arith.constant 5.000000e-01 : f32
    %251 = vector.broadcast %cst_86 : f32 to vector<8x128xf32>
    %252 = arith.mulf %251, %250 : vector<8x128xf32>
    %253 = math.tanh %252 : vector<8x128xf32>
    %254 = vector.extract_strided_slice %253 {offsets = [0, 0], sizes = [8, 32], strides = [1, 1]} : vector<8x128xf32> to vector<8x32xf32>
    %cst_87 = arith.constant 5.000000e-01 : f32
    %255 = vector.broadcast %cst_87 : f32 to vector<8x32xf32>
    %256 = arith.mulf %255, %254 : vector<8x32xf32>
    %cst_88 = arith.constant 5.000000e-01 : f32
    %257 = vector.broadcast %cst_88 : f32 to vector<8x32xf32>
    %258 = arith.addf %256, %257 : vector<8x32xf32>
    %259 = vector.extract_strided_slice %253 {offsets = [0, 96], sizes = [8, 32], strides = [1, 1]} : vector<8x128xf32> to vector<8x32xf32>
    %cst_89 = arith.constant 5.000000e-01 : f32
    %260 = vector.broadcast %cst_89 : f32 to vector<8x32xf32>
    %261 = arith.mulf %260, %259 : vector<8x32xf32>
    %cst_90 = arith.constant 5.000000e-01 : f32
    %262 = vector.broadcast %cst_90 : f32 to vector<8x32xf32>
    %263 = arith.addf %261, %262 : vector<8x32xf32>
    %264 = vector.extract_strided_slice %250 {offsets = [0, 64], sizes = [8, 32], strides = [1, 1]} : vector<8x128xf32> to vector<8x32xf32>
    %265 = math.tanh %264 : vector<8x32xf32>
    %266 = arith.mulf %258, %265 : vector<8x32xf32>
    %267 = vector.extract_strided_slice %253 {offsets = [0, 32], sizes = [8, 32], strides = [1, 1]} : vector<8x128xf32> to vector<8x32xf32>
    %cst_91 = arith.constant 5.000000e-01 : f32
    %268 = vector.broadcast %cst_91 : f32 to vector<8x32xf32>
    %269 = arith.mulf %268, %267 : vector<8x32xf32>
    %cst_92 = arith.constant 5.000000e-01 : f32
    %270 = vector.broadcast %cst_92 : f32 to vector<8x32xf32>
    %271 = arith.addf %269, %270 : vector<8x32xf32>
    %272 = arith.mulf %271, %239 : vector<8x32xf32>
    %273 = arith.addf %272, %266 : vector<8x32xf32>
    %274 = math.tanh %273 : vector<8x32xf32>
    %275 = arith.mulf %263, %274 : vector<8x32xf32>
    %276 = arith.truncf %275 : vector<8x32xf32> to vector<8x32xbf16>
    %cst_93 = arith.constant dense<0.000000e+00> : vector<8x128xf32>
    %277 = tpu.matmul %276, %3, %cst_93 {dimension_numbers = #tpu.dot_dimension_numbers<[1], [0], [0], [1], [0, 0, 1, 1], [], []>} : vector<8x32xbf16>, vector<32x128xbf16>, vector<8x128xf32> -> vector<8x128xf32>
    %278 = vector.broadcast %9 : vector<1x128xf32> to vector<8x128xf32>
    %279 = arith.addf %277, %278 : vector<8x128xf32>
    %c56 = arith.constant 56 : index
    %c0_94 = arith.constant 0 : index
    %280 = vector.load %arg12[%c56, %c0_94] : memref<64x128xf32, #tpu.memory_space<vmem>>, vector<8x128xf32>
    tpu.vector_store %arg12[%c56, %c0_94], %279 {strides = array<i32>} : memref<64x128xf32, #tpu.memory_space<vmem>>, vector<8x128xf32>,
    %c0_95 = arith.constant 0 : index
    %c0_96 = arith.constant 0 : index
    %281 = vector.load %arg12[%c0_95, %c0_96] : memref<64x128xf32, #tpu.memory_space<vmem>>, vector<8x128xf32>
    %cst_97 = arith.constant 5.000000e-01 : f32
    %282 = vector.broadcast %cst_97 : f32 to vector<8x128xf32>
    %283 = arith.mulf %282, %281 : vector<8x128xf32>
    %284 = math.tanh %283 : vector<8x128xf32>
    %285 = vector.extract_strided_slice %284 {offsets = [0, 0], sizes = [8, 32], strides = [1, 1]} : vector<8x128xf32> to vector<8x32xf32>
    %cst_98 = arith.constant 5.000000e-01 : f32
    %286 = vector.broadcast %cst_98 : f32 to vector<8x32xf32>
    %287 = arith.mulf %286, %285 : vector<8x32xf32>
    %cst_99 = arith.constant 5.000000e-01 : f32
    %288 = vector.broadcast %cst_99 : f32 to vector<8x32xf32>
    %289 = arith.addf %287, %288 : vector<8x32xf32>
    %290 = vector.extract_strided_slice %284 {offsets = [0, 96], sizes = [8, 32], strides = [1, 1]} : vector<8x128xf32> to vector<8x32xf32>
    %cst_100 = arith.constant 5.000000e-01 : f32
    %291 = vector.broadcast %cst_100 : f32 to vector<8x32xf32>
    %292 = arith.mulf %291, %290 : vector<8x32xf32>
    %cst_101 = arith.constant 5.000000e-01 : f32
    %293 = vector.broadcast %cst_101 : f32 to vector<8x32xf32>
    %294 = arith.addf %292, %293 : vector<8x32xf32>
    %295 = vector.extract_strided_slice %281 {offsets = [0, 64], sizes = [8, 32], strides = [1, 1]} : vector<8x128xf32> to vector<8x32xf32>
    %296 = math.tanh %295 : vector<8x32xf32>
    %297 = arith.mulf %289, %296 : vector<8x32xf32>
    %298 = math.tanh %297 : vector<8x32xf32>
    %299 = arith.mulf %294, %298 : vector<8x32xf32>
    %c8_102 = arith.constant 8 : index
    %c0_103 = arith.constant 0 : index
    %300 = vector.load %arg12[%c8_102, %c0_103] : memref<64x128xf32, #tpu.memory_space<vmem>>, vector<8x128xf32>
    %301 = arith.truncf %299 : vector<8x32xf32> to vector<8x32xbf16>
    %cst_104 = arith.constant dense<0.000000e+00> : vector<8x128xf32>
    %302 = tpu.matmul %301, %7, %cst_104 {dimension_numbers = #tpu.dot_dimension_numbers<[1], [0], [0], [1], [0, 0, 1, 1], [], []>} : vector<8x32xbf16>, vector<32x128xbf16>, vector<8x128xf32> -> vector<8x128xf32>
    %303 = arith.addf %300, %302 : vector<8x128xf32>
    %cst_105 = arith.constant 5.000000e-01 : f32
    %304 = vector.broadcast %cst_105 : f32 to vector<8x128xf32>
    %305 = arith.mulf %304, %303 : vector<8x128xf32>
    %306 = math.tanh %305 : vector<8x128xf32>
    %307 = vector.extract_strided_slice %306 {offsets = [0, 0], sizes = [8, 32], strides = [1, 1]} : vector<8x128xf32> to vector<8x32xf32>
    %cst_106 = arith.constant 5.000000e-01 : f32
    %308 = vector.broadcast %cst_106 : f32 to vector<8x32xf32>
    %309 = arith.mulf %308, %307 : vector<8x32xf32>
    %cst_107 = arith.constant 5.000000e-01 : f32
    %310 = vector.broadcast %cst_107 : f32 to vector<8x32xf32>
    %311 = arith.addf %309, %310 : vector<8x32xf32>
    %312 = vector.extract_strided_slice %306 {offsets = [0, 96], sizes = [8, 32], strides = [1, 1]} : vector<8x128xf32> to vector<8x32xf32>
    %cst_108 = arith.constant 5.000000e-01 : f32
    %313 = vector.broadcast %cst_108 : f32 to vector<8x32xf32>
    %314 = arith.mulf %313, %312 : vector<8x32xf32>
    %cst_109 = arith.constant 5.000000e-01 : f32
    %315 = vector.broadcast %cst_109 : f32 to vector<8x32xf32>
    %316 = arith.addf %314, %315 : vector<8x32xf32>
    %317 = vector.extract_strided_slice %303 {offsets = [0, 64], sizes = [8, 32], strides = [1, 1]} : vector<8x128xf32> to vector<8x32xf32>
    %318 = math.tanh %317 : vector<8x32xf32>
    %319 = arith.mulf %311, %318 : vector<8x32xf32>
    %320 = vector.extract_strided_slice %306 {offsets = [0, 32], sizes = [8, 32], strides = [1, 1]} : vector<8x128xf32> to vector<8x32xf32>
    %cst_110 = arith.constant 5.000000e-01 : f32
    %321 = vector.broadcast %cst_110 : f32 to vector<8x32xf32>
    %322 = arith.mulf %321, %320 : vector<8x32xf32>
    %cst_111 = arith.constant 5.000000e-01 : f32
    %323 = vector.broadcast %cst_111 : f32 to vector<8x32xf32>
    %324 = arith.addf %322, %323 : vector<8x32xf32>
    %325 = arith.mulf %324, %297 : vector<8x32xf32>
    %326 = arith.addf %325, %319 : vector<8x32xf32>
    %327 = math.tanh %326 : vector<8x32xf32>
    %328 = arith.mulf %316, %327 : vector<8x32xf32>
    %c16_112 = arith.constant 16 : index
    %c0_113 = arith.constant 0 : index
    %329 = vector.load %arg12[%c16_112, %c0_113] : memref<64x128xf32, #tpu.memory_space<vmem>>, vector<8x128xf32>
    %330 = arith.truncf %328 : vector<8x32xf32> to vector<8x32xbf16>
    %cst_114 = arith.constant dense<0.000000e+00> : vector<8x128xf32>
    %331 = tpu.matmul %330, %7, %cst_114 {dimension_numbers = #tpu.dot_dimension_numbers<[1], [0], [0], [1], [0, 0, 1, 1], [], []>} : vector<8x32xbf16>, vector<32x128xbf16>, vector<8x128xf32> -> vector<8x128xf32>
    %332 = arith.addf %329, %331 : vector<8x128xf32>
    %cst_115 = arith.constant 5.000000e-01 : f32
    %333 = vector.broadcast %cst_115 : f32 to vector<8x128xf32>
    %334 = arith.mulf %333, %332 : vector<8x128xf32>
    %335 = math.tanh %334 : vector<8x128xf32>
    %336 = vector.extract_strided_slice %335 {offsets = [0, 0], sizes = [8, 32], strides = [1, 1]} : vector<8x128xf32> to vector<8x32xf32>
    %cst_116 = arith.constant 5.000000e-01 : f32
    %337 = vector.broadcast %cst_116 : f32 to vector<8x32xf32>
    %338 = arith.mulf %337, %336 : vector<8x32xf32>
    %cst_117 = arith.constant 5.000000e-01 : f32
    %339 = vector.broadcast %cst_117 : f32 to vector<8x32xf32>
    %340 = arith.addf %338, %339 : vector<8x32xf32>
    %341 = vector.extract_strided_slice %335 {offsets = [0, 96], sizes = [8, 32], strides = [1, 1]} : vector<8x128xf32> to vector<8x32xf32>
    %cst_118 = arith.constant 5.000000e-01 : f32
    %342 = vector.broadcast %cst_118 : f32 to vector<8x32xf32>
    %343 = arith.mulf %342, %341 : vector<8x32xf32>
    %cst_119 = arith.constant 5.000000e-01 : f32
    %344 = vector.broadcast %cst_119 : f32 to vector<8x32xf32>
    %345 = arith.addf %343, %344 : vector<8x32xf32>
    %346 = vector.extract_strided_slice %332 {offsets = [0, 64], sizes = [8, 32], strides = [1, 1]} : vector<8x128xf32> to vector<8x32xf32>
    %347 = math.tanh %346 : vector<8x32xf32>
    %348 = arith.mulf %340, %347 : vector<8x32xf32>
    %349 = vector.extract_strided_slice %335 {offsets = [0, 32], sizes = [8, 32], strides = [1, 1]} : vector<8x128xf32> to vector<8x32xf32>
    %cst_120 = arith.constant 5.000000e-01 : f32
    %350 = vector.broadcast %cst_120 : f32 to vector<8x32xf32>
    %351 = arith.mulf %350, %349 : vector<8x32xf32>
    %cst_121 = arith.constant 5.000000e-01 : f32
    %352 = vector.broadcast %cst_121 : f32 to vector<8x32xf32>
    %353 = arith.addf %351, %352 : vector<8x32xf32>
    %354 = arith.mulf %353, %326 : vector<8x32xf32>
    %355 = arith.addf %354, %348 : vector<8x32xf32>
    %356 = math.tanh %355 : vector<8x32xf32>
    %357 = arith.mulf %345, %356 : vector<8x32xf32>
    %c24_122 = arith.constant 24 : index
    %c0_123 = arith.constant 0 : index
    %358 = vector.load %arg12[%c24_122, %c0_123] : memref<64x128xf32, #tpu.memory_space<vmem>>, vector<8x128xf32>
    %359 = arith.truncf %357 : vector<8x32xf32> to vector<8x32xbf16>
    %cst_124 = arith.constant dense<0.000000e+00> : vector<8x128xf32>
    %360 = tpu.matmul %359, %7, %cst_124 {dimension_numbers = #tpu.dot_dimension_numbers<[1], [0], [0], [1], [0, 0, 1, 1], [], []>} : vector<8x32xbf16>, vector<32x128xbf16>, vector<8x128xf32> -> vector<8x128xf32>
    %361 = arith.addf %358, %360 : vector<8x128xf32>
    %cst_125 = arith.constant 5.000000e-01 : f32
    %362 = vector.broadcast %cst_125 : f32 to vector<8x128xf32>
    %363 = arith.mulf %362, %361 : vector<8x128xf32>
    %364 = math.tanh %363 : vector<8x128xf32>
    %365 = vector.extract_strided_slice %364 {offsets = [0, 0], sizes = [8, 32], strides = [1, 1]} : vector<8x128xf32> to vector<8x32xf32>
    %cst_126 = arith.constant 5.000000e-01 : f32
    %366 = vector.broadcast %cst_126 : f32 to vector<8x32xf32>
    %367 = arith.mulf %366, %365 : vector<8x32xf32>
    %cst_127 = arith.constant 5.000000e-01 : f32
    %368 = vector.broadcast %cst_127 : f32 to vector<8x32xf32>
    %369 = arith.addf %367, %368 : vector<8x32xf32>
    %370 = vector.extract_strided_slice %364 {offsets = [0, 96], sizes = [8, 32], strides = [1, 1]} : vector<8x128xf32> to vector<8x32xf32>
    %cst_128 = arith.constant 5.000000e-01 : f32
    %371 = vector.broadcast %cst_128 : f32 to vector<8x32xf32>
    %372 = arith.mulf %371, %370 : vector<8x32xf32>
    %cst_129 = arith.constant 5.000000e-01 : f32
    %373 = vector.broadcast %cst_129 : f32 to vector<8x32xf32>
    %374 = arith.addf %372, %373 : vector<8x32xf32>
    %375 = vector.extract_strided_slice %361 {offsets = [0, 64], sizes = [8, 32], strides = [1, 1]} : vector<8x128xf32> to vector<8x32xf32>
    %376 = math.tanh %375 : vector<8x32xf32>
    %377 = arith.mulf %369, %376 : vector<8x32xf32>
    %378 = vector.extract_strided_slice %364 {offsets = [0, 32], sizes = [8, 32], strides = [1, 1]} : vector<8x128xf32> to vector<8x32xf32>
    %cst_130 = arith.constant 5.000000e-01 : f32
    %379 = vector.broadcast %cst_130 : f32 to vector<8x32xf32>
    %380 = arith.mulf %379, %378 : vector<8x32xf32>
    %cst_131 = arith.constant 5.000000e-01 : f32
    %381 = vector.broadcast %cst_131 : f32 to vector<8x32xf32>
    %382 = arith.addf %380, %381 : vector<8x32xf32>
    %383 = arith.mulf %382, %355 : vector<8x32xf32>
    %384 = arith.addf %383, %377 : vector<8x32xf32>
    %385 = math.tanh %384 : vector<8x32xf32>
    %386 = arith.mulf %374, %385 : vector<8x32xf32>
    %c32_132 = arith.constant 32 : index
    %c0_133 = arith.constant 0 : index
    %387 = vector.load %arg12[%c32_132, %c0_133] : memref<64x128xf32, #tpu.memory_space<vmem>>, vector<8x128xf32>
    %388 = arith.truncf %386 : vector<8x32xf32> to vector<8x32xbf16>
    %cst_134 = arith.constant dense<0.000000e+00> : vector<8x128xf32>
    %389 = tpu.matmul %388, %7, %cst_134 {dimension_numbers = #tpu.dot_dimension_numbers<[1], [0], [0], [1], [0, 0, 1, 1], [], []>} : vector<8x32xbf16>, vector<32x128xbf16>, vector<8x128xf32> -> vector<8x128xf32>
    %390 = arith.addf %387, %389 : vector<8x128xf32>
    %cst_135 = arith.constant 5.000000e-01 : f32
    %391 = vector.broadcast %cst_135 : f32 to vector<8x128xf32>
    %392 = arith.mulf %391, %390 : vector<8x128xf32>
    %393 = math.tanh %392 : vector<8x128xf32>
    %394 = vector.extract_strided_slice %393 {offsets = [0, 0], sizes = [8, 32], strides = [1, 1]} : vector<8x128xf32> to vector<8x32xf32>
    %cst_136 = arith.constant 5.000000e-01 : f32
    %395 = vector.broadcast %cst_136 : f32 to vector<8x32xf32>
    %396 = arith.mulf %395, %394 : vector<8x32xf32>
    %cst_137 = arith.constant 5.000000e-01 : f32
    %397 = vector.broadcast %cst_137 : f32 to vector<8x32xf32>
    %398 = arith.addf %396, %397 : vector<8x32xf32>
    %399 = vector.extract_strided_slice %393 {offsets = [0, 96], sizes = [8, 32], strides = [1, 1]} : vector<8x128xf32> to vector<8x32xf32>
    %cst_138 = arith.constant 5.000000e-01 : f32
    %400 = vector.broadcast %cst_138 : f32 to vector<8x32xf32>
    %401 = arith.mulf %400, %399 : vector<8x32xf32>
    %cst_139 = arith.constant 5.000000e-01 : f32
    %402 = vector.broadcast %cst_139 : f32 to vector<8x32xf32>
    %403 = arith.addf %401, %402 : vector<8x32xf32>
    %404 = vector.extract_strided_slice %390 {offsets = [0, 64], sizes = [8, 32], strides = [1, 1]} : vector<8x128xf32> to vector<8x32xf32>
    %405 = math.tanh %404 : vector<8x32xf32>
    %406 = arith.mulf %398, %405 : vector<8x32xf32>
    %407 = vector.extract_strided_slice %393 {offsets = [0, 32], sizes = [8, 32], strides = [1, 1]} : vector<8x128xf32> to vector<8x32xf32>
    %cst_140 = arith.constant 5.000000e-01 : f32
    %408 = vector.broadcast %cst_140 : f32 to vector<8x32xf32>
    %409 = arith.mulf %408, %407 : vector<8x32xf32>
    %cst_141 = arith.constant 5.000000e-01 : f32
    %410 = vector.broadcast %cst_141 : f32 to vector<8x32xf32>
    %411 = arith.addf %409, %410 : vector<8x32xf32>
    %412 = arith.mulf %411, %384 : vector<8x32xf32>
    %413 = arith.addf %412, %406 : vector<8x32xf32>
    %414 = math.tanh %413 : vector<8x32xf32>
    %415 = arith.mulf %403, %414 : vector<8x32xf32>
    %c40_142 = arith.constant 40 : index
    %c0_143 = arith.constant 0 : index
    %416 = vector.load %arg12[%c40_142, %c0_143] : memref<64x128xf32, #tpu.memory_space<vmem>>, vector<8x128xf32>
    %417 = arith.truncf %415 : vector<8x32xf32> to vector<8x32xbf16>
    %cst_144 = arith.constant dense<0.000000e+00> : vector<8x128xf32>
    %418 = tpu.matmul %417, %7, %cst_144 {dimension_numbers = #tpu.dot_dimension_numbers<[1], [0], [0], [1], [0, 0, 1, 1], [], []>} : vector<8x32xbf16>, vector<32x128xbf16>, vector<8x128xf32> -> vector<8x128xf32>
    %419 = arith.addf %416, %418 : vector<8x128xf32>
    %cst_145 = arith.constant 5.000000e-01 : f32
    %420 = vector.broadcast %cst_145 : f32 to vector<8x128xf32>
    %421 = arith.mulf %420, %419 : vector<8x128xf32>
    %422 = math.tanh %421 : vector<8x128xf32>
    %423 = vector.extract_strided_slice %422 {offsets = [0, 0], sizes = [8, 32], strides = [1, 1]} : vector<8x128xf32> to vector<8x32xf32>
    %cst_146 = arith.constant 5.000000e-01 : f32
    %424 = vector.broadcast %cst_146 : f32 to vector<8x32xf32>
    %425 = arith.mulf %424, %423 : vector<8x32xf32>
    %cst_147 = arith.constant 5.000000e-01 : f32
    %426 = vector.broadcast %cst_147 : f32 to vector<8x32xf32>
    %427 = arith.addf %425, %426 : vector<8x32xf32>
    %428 = vector.extract_strided_slice %422 {offsets = [0, 96], sizes = [8, 32], strides = [1, 1]} : vector<8x128xf32> to vector<8x32xf32>
    %cst_148 = arith.constant 5.000000e-01 : f32
    %429 = vector.broadcast %cst_148 : f32 to vector<8x32xf32>
    %430 = arith.mulf %429, %428 : vector<8x32xf32>
    %cst_149 = arith.constant 5.000000e-01 : f32
    %431 = vector.broadcast %cst_149 : f32 to vector<8x32xf32>
    %432 = arith.addf %430, %431 : vector<8x32xf32>
    %433 = vector.extract_strided_slice %419 {offsets = [0, 64], sizes = [8, 32], strides = [1, 1]} : vector<8x128xf32> to vector<8x32xf32>
    %434 = math.tanh %433 : vector<8x32xf32>
    %435 = arith.mulf %427, %434 : vector<8x32xf32>
    %436 = vector.extract_strided_slice %422 {offsets = [0, 32], sizes = [8, 32], strides = [1, 1]} : vector<8x128xf32> to vector<8x32xf32>
    %cst_150 = arith.constant 5.000000e-01 : f32
    %437 = vector.broadcast %cst_150 : f32 to vector<8x32xf32>
    %438 = arith.mulf %437, %436 : vector<8x32xf32>
    %cst_151 = arith.constant 5.000000e-01 : f32
    %439 = vector.broadcast %cst_151 : f32 to vector<8x32xf32>
    %440 = arith.addf %438, %439 : vector<8x32xf32>
    %441 = arith.mulf %440, %413 : vector<8x32xf32>
    %442 = arith.addf %441, %435 : vector<8x32xf32>
    %443 = math.tanh %442 : vector<8x32xf32>
    %444 = arith.mulf %432, %443 : vector<8x32xf32>
    %c48_152 = arith.constant 48 : index
    %c0_153 = arith.constant 0 : index
    %445 = vector.load %arg12[%c48_152, %c0_153] : memref<64x128xf32, #tpu.memory_space<vmem>>, vector<8x128xf32>
    %446 = arith.truncf %444 : vector<8x32xf32> to vector<8x32xbf16>
    %cst_154 = arith.constant dense<0.000000e+00> : vector<8x128xf32>
    %447 = tpu.matmul %446, %7, %cst_154 {dimension_numbers = #tpu.dot_dimension_numbers<[1], [0], [0], [1], [0, 0, 1, 1], [], []>} : vector<8x32xbf16>, vector<32x128xbf16>, vector<8x128xf32> -> vector<8x128xf32>
    %448 = arith.addf %445, %447 : vector<8x128xf32>
    %cst_155 = arith.constant 5.000000e-01 : f32
    %449 = vector.broadcast %cst_155 : f32 to vector<8x128xf32>
    %450 = arith.mulf %449, %448 : vector<8x128xf32>
    %451 = math.tanh %450 : vector<8x128xf32>
    %452 = vector.extract_strided_slice %451 {offsets = [0, 0], sizes = [8, 32], strides = [1, 1]} : vector<8x128xf32> to vector<8x32xf32>
    %cst_156 = arith.constant 5.000000e-01 : f32
    %453 = vector.broadcast %cst_156 : f32 to vector<8x32xf32>
    %454 = arith.mulf %453, %452 : vector<8x32xf32>
    %cst_157 = arith.constant 5.000000e-01 : f32
    %455 = vector.broadcast %cst_157 : f32 to vector<8x32xf32>
    %456 = arith.addf %454, %455 : vector<8x32xf32>
    %457 = vector.extract_strided_slice %451 {offsets = [0, 96], sizes = [8, 32], strides = [1, 1]} : vector<8x128xf32> to vector<8x32xf32>
    %cst_158 = arith.constant 5.000000e-01 : f32
    %458 = vector.broadcast %cst_158 : f32 to vector<8x32xf32>
    %459 = arith.mulf %458, %457 : vector<8x32xf32>
    %cst_159 = arith.constant 5.000000e-01 : f32
    %460 = vector.broadcast %cst_159 : f32 to vector<8x32xf32>
    %461 = arith.addf %459, %460 : vector<8x32xf32>
    %462 = vector.extract_strided_slice %448 {offsets = [0, 64], sizes = [8, 32], strides = [1, 1]} : vector<8x128xf32> to vector<8x32xf32>
    %463 = math.tanh %462 : vector<8x32xf32>
    %464 = arith.mulf %456, %463 : vector<8x32xf32>
    %465 = vector.extract_strided_slice %451 {offsets = [0, 32], sizes = [8, 32], strides = [1, 1]} : vector<8x128xf32> to vector<8x32xf32>
    %cst_160 = arith.constant 5.000000e-01 : f32
    %466 = vector.broadcast %cst_160 : f32 to vector<8x32xf32>
    %467 = arith.mulf %466, %465 : vector<8x32xf32>
    %cst_161 = arith.constant 5.000000e-01 : f32
    %468 = vector.broadcast %cst_161 : f32 to vector<8x32xf32>
    %469 = arith.addf %467, %468 : vector<8x32xf32>
    %470 = arith.mulf %469, %442 : vector<8x32xf32>
    %471 = arith.addf %470, %464 : vector<8x32xf32>
    %472 = math.tanh %471 : vector<8x32xf32>
    %473 = arith.mulf %461, %472 : vector<8x32xf32>
    %c56_162 = arith.constant 56 : index
    %c0_163 = arith.constant 0 : index
    %474 = vector.load %arg12[%c56_162, %c0_163] : memref<64x128xf32, #tpu.memory_space<vmem>>, vector<8x128xf32>
    %475 = arith.truncf %473 : vector<8x32xf32> to vector<8x32xbf16>
    %cst_164 = arith.constant dense<0.000000e+00> : vector<8x128xf32>
    %476 = tpu.matmul %475, %7, %cst_164 {dimension_numbers = #tpu.dot_dimension_numbers<[1], [0], [0], [1], [0, 0, 1, 1], [], []>} : vector<8x32xbf16>, vector<32x128xbf16>, vector<8x128xf32> -> vector<8x128xf32>
    %477 = arith.addf %474, %476 : vector<8x128xf32>
    %cst_165 = arith.constant 5.000000e-01 : f32
    %478 = vector.broadcast %cst_165 : f32 to vector<8x128xf32>
    %479 = arith.mulf %478, %477 : vector<8x128xf32>
    %480 = math.tanh %479 : vector<8x128xf32>
    %481 = vector.extract_strided_slice %480 {offsets = [0, 0], sizes = [8, 32], strides = [1, 1]} : vector<8x128xf32> to vector<8x32xf32>
    %cst_166 = arith.constant 5.000000e-01 : f32
    %482 = vector.broadcast %cst_166 : f32 to vector<8x32xf32>
    %483 = arith.mulf %482, %481 : vector<8x32xf32>
    %cst_167 = arith.constant 5.000000e-01 : f32
    %484 = vector.broadcast %cst_167 : f32 to vector<8x32xf32>
    %485 = arith.addf %483, %484 : vector<8x32xf32>
    %486 = vector.extract_strided_slice %480 {offsets = [0, 96], sizes = [8, 32], strides = [1, 1]} : vector<8x128xf32> to vector<8x32xf32>
    %cst_168 = arith.constant 5.000000e-01 : f32
    %487 = vector.broadcast %cst_168 : f32 to vector<8x32xf32>
    %488 = arith.mulf %487, %486 : vector<8x32xf32>
    %cst_169 = arith.constant 5.000000e-01 : f32
    %489 = vector.broadcast %cst_169 : f32 to vector<8x32xf32>
    %490 = arith.addf %488, %489 : vector<8x32xf32>
    %491 = vector.extract_strided_slice %477 {offsets = [0, 64], sizes = [8, 32], strides = [1, 1]} : vector<8x128xf32> to vector<8x32xf32>
    %492 = math.tanh %491 : vector<8x32xf32>
    %493 = arith.mulf %485, %492 : vector<8x32xf32>
    %494 = vector.extract_strided_slice %480 {offsets = [0, 32], sizes = [8, 32], strides = [1, 1]} : vector<8x128xf32> to vector<8x32xf32>
    %cst_170 = arith.constant 5.000000e-01 : f32
    %495 = vector.broadcast %cst_170 : f32 to vector<8x32xf32>
    %496 = arith.mulf %495, %494 : vector<8x32xf32>
    %cst_171 = arith.constant 5.000000e-01 : f32
    %497 = vector.broadcast %cst_171 : f32 to vector<8x32xf32>
    %498 = arith.addf %496, %497 : vector<8x32xf32>
    %499 = arith.mulf %498, %471 : vector<8x32xf32>
    %500 = arith.addf %499, %493 : vector<8x32xf32>
    %501 = math.tanh %500 : vector<8x32xf32>
    %502 = arith.mulf %490, %501 : vector<8x32xf32>
    %503 = tpu.concatenate %275, %502 in 0 : vector<8x32xf32>, vector<8x32xf32> -> vector<16x32xf32>
    %cst_172 = arith.constant 0.000000e+00 : f32
    %504 = vector.broadcast %cst_172 : f32 to vector<16x32xf32>
    %505 = arith.maximumf %503, %504 : vector<16x32xf32>
    %506 = arith.truncf %505 : vector<16x32xf32> to vector<16x32xbf16>
    %cst_173 = arith.constant dense<0.000000e+00> : vector<16x128xf32>
    %507 = tpu.matmul %506, %11, %cst_173 {dimension_numbers = #tpu.dot_dimension_numbers<[1], [0], [0], [1], [0, 0, 1, 1], [], []>} : vector<16x32xbf16>, vector<32x128xbf16>, vector<16x128xf32> -> vector<16x128xf32>
    %c0_174 = arith.constant 0 : index
    %c0_175 = arith.constant 0 : index
    %508 = vector.load %arg8[%c0_174, %c0_175] : memref<1x128xf32, #tpu.memory_space<vmem>>, vector<1x128xf32>
    %509 = vector.broadcast %508 : vector<1x128xf32> to vector<16x128xf32>
    %510 = arith.addf %507, %509 : vector<16x128xf32>
    %cst_176 = arith.constant 0.000000e+00 : f32
    %511 = vector.broadcast %cst_176 : f32 to vector<16x128xf32>
    %512 = arith.maximumf %510, %511 : vector<16x128xf32>
    %513 = arith.truncf %512 : vector<16x128xf32> to vector<16x128xbf16>
    %cst_177 = arith.constant dense<0.000000e+00> : vector<16x4xf32>
    %514 = tpu.matmul %513, %13, %cst_177 {dimension_numbers = #tpu.dot_dimension_numbers<[1], [0], [0], [1], [0, 0, 1, 1], [], []>} : vector<16x128xbf16>, vector<128x4xbf16>, vector<16x4xf32> -> vector<16x4xf32>
    %c0_178 = arith.constant 0 : index
    %c0_179 = arith.constant 0 : index
    %515 = vector.load %arg10[%c0_178, %c0_179] : memref<1x4xf32, #tpu.memory_space<vmem>>, vector<1x4xf32>
    %516 = vector.broadcast %515 : vector<1x4xf32> to vector<16x4xf32>
    %517 = arith.addf %514, %516 : vector<16x4xf32>
    %c0_180 = arith.constant 0 : index
    %c0_181 = arith.constant 0 : index
    %518 = vector.load %arg11[%c0_180, %c0_181] : memref<16x4xf32, #tpu.memory_space<vmem>>, vector<16x4xf32>
    tpu.vector_store %arg11[%c0_180, %c0_181], %517 {strides = array<i32>} : memref<16x4xf32, #tpu.memory_space<vmem>>, vector<16x4xf32>,
    return
  }
}

</mosaic_0001>

<llo_original>
// kernel: my_lstm_forward.1
$region0: #{my_lstm_forward.1}
  #allocation0 [shape = 'u32[]', space=smem, size = 0x4, offset = 0x4, fixed_abs, tag = 'smem constant byte address 0x4 - core index']
  #allocation1 [shape = 'u32[72,128]{1,0:T(1,128)}', space=vmem, size = 0x9000, scoped, tag = 'internal scratch']
  #allocation2 [shape = 'f32[64,128]{1,0:T(8,128)}', space=vmem, size = 0x8000, scoped, tag = 'scratch operand']
  %s0 = inlined_call_operand.vmem [shape: f32[64,16], index: 0, kind: input, shape index: {}]
  %s1 = inlined_call_operand.vmem [shape: f32[16,128], index: 1, kind: input, shape index: {}]
  %s2 = inlined_call_operand.vmem [shape: f32[32,128], index: 2, kind: input, shape index: {}]
  %s3 = inlined_call_operand.vmem [shape: f32[1,128], index: 3, kind: input, shape index: {}]
  %s4 = inlined_call_operand.vmem [shape: f32[32,128], index: 4, kind: input, shape index: {}]
  %s5 = inlined_call_operand.vmem [shape: f32[32,128], index: 5, kind: input, shape index: {}]
  %s6 = inlined_call_operand.vmem [shape: f32[1,128], index: 6, kind: input, shape index: {}]
  %s7 = inlined_call_operand.vmem [shape: f32[32,128], index: 7, kind: input, shape index: {}]
  %s8 = inlined_call_operand.vmem [shape: f32[1,128], index: 8, kind: input, shape index: {}]
  %s9 = inlined_call_operand.vmem [shape: f32[128,4], index: 9, kind: input, shape index: {}]
  %s10 = inlined_call_operand.vmem [shape: f32[1,4], index: 10, kind: input, shape index: {}]
  %s11 = inlined_call_operand.vmem [shape: f32[16,4], index: 11, kind: output, shape index: {}]
  %s12 = sld [smem:[#allocation0]]
  $region54: #{my_lstm_forward.1} parent=0
    _
  %s14 = ssub.s32 1, %s12
  %s15 = scalar_select 0, %s14, %s12
  // Predicated region
  $region2: #{my_lstm_forward.1} parent=0 // pred_check
    _
  $region3: #{my_lstm_forward.1} parent=0 // pred_check_branch
    %17 = sbr.rel (0) target = $region5
  $region4: #{my_lstm_forward.1} parent=0 // pred_region
    _
  $region5: #{my_lstm_forward.1} parent=0 // pred_fallthru
    _
  // Predicated region
  $region6: #{my_lstm_forward.1} parent=0 // pred_check
    _
  $region7: #{my_lstm_forward.1} parent=0 // pred_check_branch
    %19 = sbr.rel (0) target = $region9
  $region8: #{my_lstm_forward.1} parent=0 // pred_region
    _
  $region9: #{my_lstm_forward.1} parent=0 // pred_fallthru
    _
  // Predicated region
  $region10: #{my_lstm_forward.1} parent=0 // pred_check
    _
  $region11: #{my_lstm_forward.1} parent=0 // pred_check_branch
    %21 = sbr.rel (0) target = $region13
  $region12: #{my_lstm_forward.1} parent=0 // pred_region
    _
  $region13: #{my_lstm_forward.1} parent=0 // pred_fallthru
    _
  // Predicated region
  $region14: #{my_lstm_forward.1} parent=0 // pred_check
    _
  $region15: #{my_lstm_forward.1} parent=0 // pred_check_branch
    %23 = sbr.rel (0) target = $region17
  $region16: #{my_lstm_forward.1} parent=0 // pred_region
    _
  $region17: #{my_lstm_forward.1} parent=0 // pred_fallthru
    _
  // Predicated region
  $region18: #{my_lstm_forward.1} parent=0 // pred_check
    _
  $region19: #{my_lstm_forward.1} parent=0 // pred_check_branch
    %25 = sbr.rel (0) target = $region21
  $region20: #{my_lstm_forward.1} parent=0 // pred_region
    _
  $region21: #{my_lstm_forward.1} parent=0 // pred_fallthru
    _
  // Predicated region
  $region22: #{my_lstm_forward.1} parent=0 // pred_check
    _
  $region23: #{my_lstm_forward.1} parent=0 // pred_check_branch
    %27 = sbr.rel (0) target = $region25
  $region24: #{my_lstm_forward.1} parent=0 // pred_region
    _
  $region25: #{my_lstm_forward.1} parent=0 // pred_fallthru
    _
  // Predicated region
  $region26: #{my_lstm_forward.1} parent=0 // pred_check
    _
  $region27: #{my_lstm_forward.1} parent=0 // pred_check_branch
    %29 = sbr.rel (0) target = $region29
  $region28: #{my_lstm_forward.1} parent=0 // pred_region
    _
  $region29: #{my_lstm_forward.1} parent=0 // pred_fallthru
    _
  // Predicated region
  $region30: #{my_lstm_forward.1} parent=0 // pred_check
    _
  $region31: #{my_lstm_forward.1} parent=0 // pred_check_branch
    %31 = sbr.rel (0) target = $region33
  $region32: #{my_lstm_forward.1} parent=0 // pred_region
    _
  $region33: #{my_lstm_forward.1} parent=0 // pred_fallthru
    _
  // Predicated region
  $region34: #{my_lstm_forward.1} parent=0 // pred_check
    _
  $region35: #{my_lstm_forward.1} parent=0 // pred_check_branch
    %33 = sbr.rel (0) target = $region37
  $region36: #{my_lstm_forward.1} parent=0 // pred_region
    _
  $region37: #{my_lstm_forward.1} parent=0 // pred_fallthru
    _
  // Predicated region
  $region38: #{my_lstm_forward.1} parent=0 // pred_check
    _
  $region39: #{my_lstm_forward.1} parent=0 // pred_check_branch
    %35 = sbr.rel (0) target = $region41
  $region40: #{my_lstm_forward.1} parent=0 // pred_region
    _
  $region41: #{my_lstm_forward.1} parent=0 // pred_fallthru
    _
  // Predicated region
  $region42: #{my_lstm_forward.1} parent=0 // pred_check
    _
  $region43: #{my_lstm_forward.1} parent=0 // pred_check_branch
    %37 = sbr.rel (0) target = $region45
  $region44: #{my_lstm_forward.1} parent=0 // pred_region
    _
  $region45: #{my_lstm_forward.1} parent=0 // pred_fallthru
    _
  %v39 = vld [vmem:[%s1] sm:$0xff]
  %v40 = vld [vmem:[%s1 + $0x8] sm:$0xff]
  %v41 = vpack.c.bf16 %v40, %v39
  %v42 = vld [vmem:[%s4] sm:$0xff]
  %v43 = vld [vmem:[%s4 + $0x8] sm:$0xff]
  %v44 = vld [vmem:[%s4 + $0x10] sm:$0xff]
  %v45 = vld [vmem:[%s4 + $0x18] sm:$0xff]
  %v46 = vpack.c.bf16 %v43, %v42
  %v47 = vpack.c.bf16 %v45, %v44
  %v48 = vld [vmem:[%s2] sm:$0xff]
  %v49 = vld [vmem:[%s2 + $0x8] sm:$0xff]
  %v50 = vld [vmem:[%s2 + $0x10] sm:$0xff]
  %v51 = vld [vmem:[%s2 + $0x18] sm:$0xff]
  %v52 = vpack.c.bf16 %v49, %v48
  %v53 = vpack.c.bf16 %v51, %v50
  %v54 = vld [vmem:[%s5] sm:$0xff]
  %v55 = vld [vmem:[%s5 + $0x8] sm:$0xff]
  %v56 = vld [vmem:[%s5 + $0x10] sm:$0xff]
  %v57 = vld [vmem:[%s5 + $0x18] sm:$0xff]
  %v58 = vpack.c.bf16 %v55, %v54
  %v59 = vpack.c.bf16 %v57, %v56
  %v60 = vld [vmem:[%s3] sm:$0x1]
  %v61 = vld [vmem:[%s6] sm:$0x1]
  %v62 = vld [vmem:[%s7] sm:$0xff]
  %v63 = vld [vmem:[%s7 + $0x8] sm:$0xff]
  %v64 = vld [vmem:[%s7 + $0x10] sm:$0xff]
  %v65 = vld [vmem:[%s7 + $0x18] sm:$0xff]
  %v66 = vpack.c.bf16 %v63, %v62
  %v67 = vpack.c.bf16 %v65, %v64
  %v68 = vld [vmem:[%s9] sm:$0xff]
  %v69 = vld [vmem:[%s9 + $0x8] sm:$0xff]
  %v70 = vld [vmem:[%s9 + $0x10] sm:$0xff]
  %v71 = vld [vmem:[%s9 + $0x18] sm:$0xff]
  %v72 = vld [vmem:[%s9 + $0x20] sm:$0xff]
  %v73 = vld [vmem:[%s9 + $0x28] sm:$0xff]
  %v74 = vld [vmem:[%s9 + $0x30] sm:$0xff]
  %v75 = vld [vmem:[%s9 + $0x38] sm:$0xff]
  %v76 = vld [vmem:[%s9 + $0x40] sm:$0xff]
  %v77 = vld [vmem:[%s9 + $0x48] sm:$0xff]
  %v78 = vld [vmem:[%s9 + $0x50] sm:$0xff]
  %v79 = vld [vmem:[%s9 + $0x58] sm:$0xff]
  %v80 = vld [vmem:[%s9 + $0x60] sm:$0xff]
  %v81 = vld [vmem:[%s9 + $0x68] sm:$0xff]
  %v82 = vld [vmem:[%s9 + $0x70] sm:$0xff]
  %v83 = vld [vmem:[%s9 + $0x78] sm:$0xff]
  %v84 = vpack.c.bf16 %v69, %v68
  %v85 = vpack.c.bf16 %v71, %v70
  %v86 = vpack.c.bf16 %v73, %v72
  %v87 = vpack.c.bf16 %v75, %v74
  %v88 = vpack.c.bf16 %v77, %v76
  %v89 = vpack.c.bf16 %v79, %v78
  %v90 = vpack.c.bf16 %v81, %v80
  %v91 = vpack.c.bf16 %v83, %v82
  %v92 = vld [vmem:[%s0] sm:$0xff]
  %v93 = vld [vmem:[%s0 + $0x8] sm:$0xff]
  %v94 = vld [vmem:[%s0 + $0x10] sm:$0xff]
  %v95 = vld [vmem:[%s0 + $0x18] sm:$0xff]
  %v96 = vld [vmem:[%s0 + $0x20] sm:$0xff]
  %v97 = vld [vmem:[%s0 + $0x28] sm:$0xff]
  %v98 = vld [vmem:[%s0 + $0x30] sm:$0xff]
  %v99 = vld [vmem:[%s0 + $0x38] sm:$0xff]
  %v100 = vpack.c.bf16 %v93, %v92
  %v101 = vpack.c.bf16 %v95, %v94
  %v102 = vpack.c.bf16 %v97, %v96
  %v103 = vpack.c.bf16 %v99, %v98
  %v105 = vperm.slane %v60, 0
  %vm107 = vcmask 130048
  %v109 = vsel %vm107, %v100, 0
  %v112 = vsel %vm107, %v101, 0
  %v115 = vsel %vm107, %v102, 0
  %v118 = vsel %vm107, %v103, 0
  %120 = vmatpush.bf16.msra.mxu0 0
  %121 = vmatpush.bf16.msra.mxu0 0
  %122 = vmatpush.bf16.msra.mxu0 0
  %123 = vmatpush.bf16.msra.mxu0 0
  %124 = vmatpush.bf16.msra.mxu0 0
  %125 = vmatpush.bf16.msra.mxu0 0
  %126 = vmatpush.bf16.msra.mxu0 0
  %127 = vmatpush.bf16.msra.mxu0 %v41
  %128 = vmatmul.bf16.gmra.mxu0 %v109
  %v129 = vpop.f32.mrf.mxu0
  %v130 = vadd.f32 %v105, %v129
  %v131 = vpop.f32.mrf.mxu0
  %v132 = vadd.f32 %v105, %v131
  %133 = vmatmul.bf16.gmra.mxu0 %v112
  %v134 = vpop.f32.mrf.mxu0
  %v135 = vadd.f32 %v105, %v134
  %v136 = vpop.f32.mrf.mxu0
  %v137 = vadd.f32 %v105, %v136
  %138 = vmatmul.bf16.gmra.mxu0 %v115
  %v139 = vpop.f32.mrf.mxu0
  %v140 = vadd.f32 %v105, %v139
  %v141 = vpop.f32.mrf.mxu0
  %v142 = vadd.f32 %v105, %v141
  %143 = vmatmul.bf16.gmra.mxu0 %v118
  %v144 = vpop.f32.mrf.mxu0
  %v145 = vadd.f32 %v105, %v144
  %v146 = vpop.f32.mrf.mxu0
  %v147 = vadd.f32 %v105, %v146
  %148 = vdwg.mxu0
  %v149 = vmul.f32 %v130, 0.5
  %v150 = vtanh.pop %v149
  %v151 = vmul.f32 %v150, 0.5
  %v152 = vadd.f32 %v151, 0.5
  %v153 = vtanh.pop %v130
  %155 = vrot.lane.b32.xlu0 %v153, 64
  %v156 = vpop.permute.xlu0 %155
  %v158 = vmul.f32 %v152, %v156
  %v159 = vtanh.pop %v158
  %161 = vrot.lane.b32.xlu0 %v159, 96
  %v162 = vpop.permute.xlu0 %161
  %v164 = vmul.f32 %v152, %v162
  %v165 = vpack.c.bf16 %v164, %v164
  %v167 = vperm.slane %v61, 0
  %170 = vrot.lane.b32.xlu0 %v165, 32
  %v171 = vpop.permute.xlu0 %170
  %vm172 = vcmask 261120
  %v174 = vsel %vm172, %v171, 0
  %176 = vmatpush.bf16.msra.mxu0 0
  %177 = vmatpush.bf16.msra.mxu0 0
  %178 = vmatpush.bf16.msra.mxu0 0
  %179 = vmatpush.bf16.msra.mxu0 0
  %180 = vmatpush.bf16.msra.mxu0 0
  %181 = vmatpush.bf16.msra.mxu0 0
  %182 = vmatpush.bf16.msra.mxu0 %v47
  %183 = vmatpush.bf16.msra.mxu0 %v46
  %184 = vmatmul.bf16.gmra.mxu0 %v174
  %v185 = vpop.f32.mrf.mxu0
  %v186 = vadd.f32 %v167, %v185
  %v187 = vpop.f32.mrf.mxu0
  %188 = vdwg.mxu0
  %189 = vst [vmem:[#allocation2] sm:$0xff] %v186
  %190 = vmatpush.bf16.msra.mxu0 0
  %191 = vmatpush.bf16.msra.mxu0 0
  %192 = vmatpush.bf16.msra.mxu0 0
  %193 = vmatpush.bf16.msra.mxu0 0
  %194 = vmatpush.bf16.msra.mxu0 0
  %195 = vmatpush.bf16.msra.mxu0 0
  %196 = vmatpush.bf16.msra.mxu0 %v53
  %197 = vmatpush.bf16.msra.mxu0 %v52
  %198 = vmatmul.bf16.gmra.mxu0 %v174
  %v199 = vpop.f32.mrf.mxu0
  %v200 = vadd.f32 0.0, %v199
  %v201 = vpop.f32.mrf.mxu0
  %202 = vdwg.mxu0
  %v203 = vadd.f32 %v132, %v200
  %v204 = vmul.f32 %v203, 0.5
  %v205 = vtanh.pop %v204
  %v206 = vmul.f32 %v205, 0.5
  %v207 = vadd.f32 %v206, 0.5
  %v208 = vtanh.pop %v203
  %210 = vrot.lane.b32.xlu0 %v208, 64
  %v211 = vpop.permute.xlu0 %210
  %v213 = vmul.f32 %v207, %v211
  %215 = vrot.lane.b32.xlu0 %v158, 32
  %v216 = vpop.permute.xlu0 %215
  %v218 = vmul.f32 %v207, %v216
  %220 = vrot.lane.b32.xlu0 %v213, 32
  %v221 = vpop.permute.xlu0 %220
  %v223 = vadd.f32 %v218, %v221
  %v224 = vtanh.pop %v223
  %226 = vrot.lane.b32.xlu0 %v224, 64
  %v227 = vpop.permute.xlu0 %226
  %v229 = vmul.f32 %v207, %v227
  %v230 = vpack.c.bf16 %v229, %v229
  %232 = vrot.lane.b32.xlu0 %v230, 32
  %v233 = vpop.permute.xlu0 %232
  %v235 = vsel %vm172, %v233, 0
  %237 = vmatpush.bf16.msra.mxu0 0
  %238 = vmatpush.bf16.msra.mxu0 0
  %239 = vmatpush.bf16.msra.mxu0 0
  %240 = vmatpush.bf16.msra.mxu0 0
  %241 = vmatpush.bf16.msra.mxu0 0
  %242 = vmatpush.bf16.msra.mxu0 0
  %243 = vmatpush.bf16.msra.mxu0 %v47
  %244 = vmatpush.bf16.msra.mxu0 %v46
  %245 = vmatmul.bf16.gmra.mxu0 %v235
  %v246 = vpop.f32.mrf.mxu0
  %v247 = vadd.f32 %v167, %v246
  %v248 = vpop.f32.mrf.mxu0
  %249 = vdwg.mxu0
  %250 = vst [vmem:[#allocation2 + $0x8] sm:$0xff] %v247
  %251 = vmatpush.bf16.msra.mxu0 0
  %252 = vmatpush.bf16.msra.mxu0 0
  %253 = vmatpush.bf16.msra.mxu0 0
  %254 = vmatpush.bf16.msra.mxu0 0
  %255 = vmatpush.bf16.msra.mxu0 0
  %256 = vmatpush.bf16.msra.mxu0 0
  %257 = vmatpush.bf16.msra.mxu0 %v53
  %258 = vmatpush.bf16.msra.mxu0 %v52
  %259 = vmatmul.bf16.gmra.mxu0 %v235
  %v260 = vpop.f32.mrf.mxu0
  %v261 = vadd.f32 0.0, %v260
  %v262 = vpop.f32.mrf.mxu0
  %263 = vdwg.mxu0
  %v264 = vadd.f32 %v135, %v261
  %v265 = vmul.f32 %v264, 0.5
  %v266 = vtanh.pop %v265
  %v267 = vmul.f32 %v266, 0.5
  %v268 = vadd.f32 %v267, 0.5
  %v269 = vtanh.pop %v264
  %271 = vrot.lane.b32.xlu0 %v269, 64
  %v272 = vpop.permute.xlu0 %271
  %v274 = vmul.f32 %v268, %v272
  %v275 = vmul.f32 %v268, %v223
  %277 = vrot.lane.b32.xlu0 %v274, 32
  %v278 = vpop.permute.xlu0 %277
  %v280 = vadd.f32 %v275, %v278
  %v281 = vtanh.pop %v280
  %283 = vrot.lane.b32.xlu0 %v281, 64
  %v284 = vpop.permute.xlu0 %283
  %v286 = vmul.f32 %v268, %v284
  %v287 = vpack.c.bf16 %v286, %v286
  %289 = vrot.lane.b32.xlu0 %v287, 32
  %v290 = vpop.permute.xlu0 %289
  %v292 = vsel %vm172, %v290, 0
  %294 = vmatpush.bf16.msra.mxu0 0
  %295 = vmatpush.bf16.msra.mxu0 0
  %296 = vmatpush.bf16.msra.mxu0 0
  %297 = vmatpush.bf16.msra.mxu0 0
  %298 = vmatpush.bf16.msra.mxu0 0
  %299 = vmatpush.bf16.msra.mxu0 0
  %300 = vmatpush.bf16.msra.mxu0 %v47
  %301 = vmatpush.bf16.msra.mxu0 %v46
  %302 = vmatmul.bf16.gmra.mxu0 %v292
  %v303 = vpop.f32.mrf.mxu0
  %v304 = vadd.f32 %v167, %v303
  %v305 = vpop.f32.mrf.mxu0
  %306 = vdwg.mxu0
  %307 = vst [vmem:[#allocation2 + $0x10] sm:$0xff] %v304
  %308 = vmatpush.bf16.msra.mxu0 0
  %309 = vmatpush.bf16.msra.mxu0 0
  %310 = vmatpush.bf16.msra.mxu0 0
  %311 = vmatpush.bf16.msra.mxu0 0
  %312 = vmatpush.bf16.msra.mxu0 0
  %313 = vmatpush.bf16.msra.mxu0 0
  %314 = vmatpush.bf16.msra.mxu0 %v53
  %315 = vmatpush.bf16.msra.mxu0 %v52
  %316 = vmatmul.bf16.gmra.mxu0 %v292
  %v317 = vpop.f32.mrf.mxu0
  %v318 = vadd.f32 0.0, %v317
  %v319 = vpop.f32.mrf.mxu0
  %320 = vdwg.mxu0
  %v321 = vadd.f32 %v137, %v318
  %v322 = vmul.f32 %v321, 0.5
  %v323 = vtanh.pop %v322
  %v324 = vmul.f32 %v323, 0.5
  %v325 = vadd.f32 %v324, 0.5
  %v326 = vtanh.pop %v321
  %328 = vrot.lane.b32.xlu0 %v326, 64
  %v329 = vpop.permute.xlu0 %328
  %v331 = vmul.f32 %v325, %v329
  %v332 = vmul.f32 %v325, %v280
  %334 = vrot.lane.b32.xlu0 %v331, 32
  %v335 = vpop.permute.xlu0 %334
  %v337 = vadd.f32 %v332, %v335
  %v338 = vtanh.pop %v337
  %340 = vrot.lane.b32.xlu0 %v338, 64
  %v341 = vpop.permute.xlu0 %340
  %v343 = vmul.f32 %v325, %v341
  %v344 = vpack.c.bf16 %v343, %v343
  %346 = vrot.lane.b32.xlu0 %v344, 32
  %v347 = vpop.permute.xlu0 %346
  %v349 = vsel %vm172, %v347, 0
  %351 = vmatpush.bf16.msra.mxu0 0
  %352 = vmatpush.bf16.msra.mxu0 0
  %353 = vmatpush.bf16.msra.mxu0 0
  %354 = vmatpush.bf16.msra.mxu0 0
  %355 = vmatpush.bf16.msra.mxu0 0
  %356 = vmatpush.bf16.msra.mxu0 0
  %357 = vmatpush.bf16.msra.mxu0 %v47
  %358 = vmatpush.bf16.msra.mxu0 %v46
  %359 = vmatmul.bf16.gmra.mxu0 %v349
  %v360 = vpop.f32.mrf.mxu0
  %v361 = vadd.f32 %v167, %v360
  %v362 = vpop.f32.mrf.mxu0
  %363 = vdwg.mxu0
  %364 = vst [vmem:[#allocation2 + $0x18] sm:$0xff] %v361
  %365 = vmatpush.bf16.msra.mxu0 0
  %366 = vmatpush.bf16.msra.mxu0 0
  %367 = vmatpush.bf16.msra.mxu0 0
  %368 = vmatpush.bf16.msra.mxu0 0
  %369 = vmatpush.bf16.msra.mxu0 0
  %370 = vmatpush.bf16.msra.mxu0 0
  %371 = vmatpush.bf16.msra.mxu0 %v53
  %372 = vmatpush.bf16.msra.mxu0 %v52
  %373 = vmatmul.bf16.gmra.mxu0 %v349
  %v374 = vpop.f32.mrf.mxu0
  %v375 = vadd.f32 0.0, %v374
  %v376 = vpop.f32.mrf.mxu0
  %377 = vdwg.mxu0
  %v378 = vadd.f32 %v140, %v375
  %v379 = vmul.f32 %v378, 0.5
  %v380 = vtanh.pop %v379
  %v381 = vmul.f32 %v380, 0.5
  %v382 = vadd.f32 %v381, 0.5
  %v383 = vtanh.pop %v378
  %385 = vrot.lane.b32.xlu0 %v383, 64
  %v386 = vpop.permute.xlu0 %385
  %v388 = vmul.f32 %v382, %v386
  %v389 = vmul.f32 %v382, %v337
  %391 = vrot.lane.b32.xlu0 %v388, 32
  %v392 = vpop.permute.xlu0 %391
  %v394 = vadd.f32 %v389, %v392
  %v395 = vtanh.pop %v394
  %397 = vrot.lane.b32.xlu0 %v395, 64
  %v398 = vpop.permute.xlu0 %397
  %v400 = vmul.f32 %v382, %v398
  %v401 = vpack.c.bf16 %v400, %v400
  %403 = vrot.lane.b32.xlu0 %v401, 32
  %v404 = vpop.permute.xlu0 %403
  %v406 = vsel %vm172, %v404, 0
  %408 = vmatpush.bf16.msra.mxu0 0
  %409 = vmatpush.bf16.msra.mxu0 0
  %410 = vmatpush.bf16.msra.mxu0 0
  %411 = vmatpush.bf16.msra.mxu0 0
  %412 = vmatpush.bf16.msra.mxu0 0
  %413 = vmatpush.bf16.msra.mxu0 0
  %414 = vmatpush.bf16.msra.mxu0 %v47
  %415 = vmatpush.bf16.msra.mxu0 %v46
  %416 = vmatmul.bf16.gmra.mxu0 %v406
  %v417 = vpop.f32.mrf.mxu0
  %v418 = vadd.f32 %v167, %v417
  %v419 = vpop.f32.mrf.mxu0
  %420 = vdwg.mxu0
  %421 = vst [vmem:[#allocation2 + $0x20] sm:$0xff] %v418
  %422 = vmatpush.bf16.msra.mxu0 0
  %423 = vmatpush.bf16.msra.mxu0 0
  %424 = vmatpush.bf16.msra.mxu0 0
  %425 = vmatpush.bf16.msra.mxu0 0
  %426 = vmatpush.bf16.msra.mxu0 0
  %427 = vmatpush.bf16.msra.mxu0 0
  %428 = vmatpush.bf16.msra.mxu0 %v53
  %429 = vmatpush.bf16.msra.mxu0 %v52
  %430 = vmatmul.bf16.gmra.mxu0 %v406
  %v431 = vpop.f32.mrf.mxu0
  %v432 = vadd.f32 0.0, %v431
  %v433 = vpop.f32.mrf.mxu0
  %434 = vdwg.mxu0
  %v435 = vadd.f32 %v142, %v432
  %v436 = vmul.f32 %v435, 0.5
  %v437 = vtanh.pop %v436
  %v438 = vmul.f32 %v437, 0.5
  %v439 = vadd.f32 %v438, 0.5
  %v440 = vtanh.pop %v435
  %442 = vrot.lane.b32.xlu0 %v440, 64
  %v443 = vpop.permute.xlu0 %442
  %v445 = vmul.f32 %v439, %v443
  %v446 = vmul.f32 %v439, %v394
  %448 = vrot.lane.b32.xlu0 %v445, 32
  %v449 = vpop.permute.xlu0 %448
  %v451 = vadd.f32 %v446, %v449
  %v452 = vtanh.pop %v451
  %454 = vrot.lane.b32.xlu0 %v452, 64
  %v455 = vpop.permute.xlu0 %454
  %v457 = vmul.f32 %v439, %v455
  %v458 = vpack.c.bf16 %v457, %v457
  %460 = vrot.lane.b32.xlu0 %v458, 32
  %v461 = vpop.permute.xlu0 %460
  %v463 = vsel %vm172, %v461, 0
  %465 = vmatpush.bf16.msra.mxu0 0
  %466 = vmatpush.bf16.msra.mxu0 0
  %467 = vmatpush.bf16.msra.mxu0 0
  %468 = vmatpush.bf16.msra.mxu0 0
  %469 = vmatpush.bf16.msra.mxu0 0
  %470 = vmatpush.bf16.msra.mxu0 0
  %471 = vmatpush.bf16.msra.mxu0 %v47
  %472 = vmatpush.bf16.msra.mxu0 %v46
  %473 = vmatmul.bf16.gmra.mxu0 %v463
  %v474 = vpop.f32.mrf.mxu0
  %v475 = vadd.f32 %v167, %v474
  %v476 = vpop.f32.mrf.mxu0
  %477 = vdwg.mxu0
  %478 = vst [vmem:[#allocation2 + $0x28] sm:$0xff] %v475
  %479 = vmatpush.bf16.msra.mxu0 0
  %480 = vmatpush.bf16.msra.mxu0 0
  %481 = vmatpush.bf16.msra.mxu0 0
  %482 = vmatpush.bf16.msra.mxu0 0
  %483 = vmatpush.bf16.msra.mxu0 0
  %484 = vmatpush.bf16.msra.mxu0 0
  %485 = vmatpush.bf16.msra.mxu0 %v53
  %486 = vmatpush.bf16.msra.mxu0 %v52
  %487 = vmatmul.bf16.gmra.mxu0 %v463
  %v488 = vpop.f32.mrf.mxu0
  %v489 = vadd.f32 0.0, %v488
  %v490 = vpop.f32.mrf.mxu0
  %491 = vdwg.mxu0
  %v492 = vadd.f32 %v145, %v489
  %v493 = vmul.f32 %v492, 0.5
  %v494 = vtanh.pop %v493
  %v495 = vmul.f32 %v494, 0.5
  %v496 = vadd.f32 %v495, 0.5
  %v497 = vtanh.pop %v492
  %499 = vrot.lane.b32.xlu0 %v497, 64
  %v500 = vpop.permute.xlu0 %499
  %v502 = vmul.f32 %v496, %v500
  %v503 = vmul.f32 %v496, %v451
  %505 = vrot.lane.b32.xlu0 %v502, 32
  %v506 = vpop.permute.xlu0 %505
  %v508 = vadd.f32 %v503, %v506
  %v509 = vtanh.pop %v508
  %511 = vrot.lane.b32.xlu0 %v509, 64
  %v512 = vpop.permute.xlu0 %511
  %v514 = vmul.f32 %v496, %v512
  %v515 = vpack.c.bf16 %v514, %v514
  %517 = vrot.lane.b32.xlu0 %v515, 32
  %v518 = vpop.permute.xlu0 %517
  %v520 = vsel %vm172, %v518, 0
  %522 = vmatpush.bf16.msra.mxu0 0
  %523 = vmatpush.bf16.msra.mxu0 0
  %524 = vmatpush.bf16.msra.mxu0 0
  %525 = vmatpush.bf16.msra.mxu0 0
  %526 = vmatpush.bf16.msra.mxu0 0
  %527 = vmatpush.bf16.msra.mxu0 0
  %528 = vmatpush.bf16.msra.mxu0 %v47
  %529 = vmatpush.bf16.msra.mxu0 %v46
  %530 = vmatmul.bf16.gmra.mxu0 %v520
  %v531 = vpop.f32.mrf.mxu0
  %v532 = vadd.f32 %v167, %v531
  %v533 = vpop.f32.mrf.mxu0
  %534 = vdwg.mxu0
  %535 = vst [vmem:[#allocation2 + $0x30] sm:$0xff] %v532
  %536 = vmatpush.bf16.msra.mxu0 0
  %537 = vmatpush.bf16.msra.mxu0 0
  %538 = vmatpush.bf16.msra.mxu0 0
  %539 = vmatpush.bf16.msra.mxu0 0
  %540 = vmatpush.bf16.msra.mxu0 0
  %541 = vmatpush.bf16.msra.mxu0 0
  %542 = vmatpush.bf16.msra.mxu0 %v53
  %543 = vmatpush.bf16.msra.mxu0 %v52
  %544 = vmatmul.bf16.gmra.mxu0 %v520
  %v545 = vpop.f32.mrf.mxu0
  %v546 = vadd.f32 0.0, %v545
  %v547 = vpop.f32.mrf.mxu0
  %548 = vdwg.mxu0
  %v549 = vadd.f32 %v147, %v546
  %v550 = vmul.f32 %v549, 0.5
  %v551 = vtanh.pop %v550
  %v552 = vmul.f32 %v551, 0.5
  %v553 = vadd.f32 %v552, 0.5
  %v554 = vtanh.pop %v549
  %556 = vrot.lane.b32.xlu0 %v554, 64
  %v557 = vpop.permute.xlu0 %556
  %v559 = vmul.f32 %v553, %v557
  %v560 = vmul.f32 %v553, %v508
  %562 = vrot.lane.b32.xlu0 %v559, 32
  %v563 = vpop.permute.xlu0 %562
  %v565 = vadd.f32 %v560, %v563
  %v566 = vtanh.pop %v565
  %568 = vrot.lane.b32.xlu0 %v566, 64
  %v569 = vpop.permute.xlu0 %568
  %v571 = vmul.f32 %v553, %v569
  %v572 = vpack.c.bf16 %v571, %v571
  %574 = vrot.lane.b32.xlu0 %v572, 32
  %v575 = vpop.permute.xlu0 %574
  %v577 = vsel %vm172, %v575, 0
  %579 = vmatpush.bf16.msra.mxu0 0
  %580 = vmatpush.bf16.msra.mxu0 0
  %581 = vmatpush.bf16.msra.mxu0 0
  %582 = vmatpush.bf16.msra.mxu0 0
  %583 = vmatpush.bf16.msra.mxu0 0
  %584 = vmatpush.bf16.msra.mxu0 0
  %585 = vmatpush.bf16.msra.mxu0 %v47
  %586 = vmatpush.bf16.msra.mxu0 %v46
  %587 = vmatmul.bf16.gmra.mxu0 %v577
  %v588 = vpop.f32.mrf.mxu0
  %v589 = vadd.f32 %v167, %v588
  %v590 = vpop.f32.mrf.mxu0
  %591 = vdwg.mxu0
  %592 = vst [vmem:[#allocation2 + $0x38] sm:$0xff] %v589
  %v593 = vld [vmem:[#allocation2] sm:$0xff]
  %v594 = vmul.f32 %v593, 0.5
  %v595 = vtanh.pop %v594
  %v596 = vmul.f32 %v595, 0.5
  %v597 = vadd.f32 %v596, 0.5
  %v598 = vtanh.pop %v593
  %600 = vrot.lane.b32.xlu0 %v598, 64
  %v601 = vpop.permute.xlu0 %600
  %v603 = vmul.f32 %v597, %v601
  %v604 = vtanh.pop %v603
  %606 = vrot.lane.b32.xlu0 %v604, 96
  %v607 = vpop.permute.xlu0 %606
  %v609 = vmul.f32 %v597, %v607
  %v610 = vld [vmem:[#allocation2 + $0x8] sm:$0xff]
  %v611 = vpack.c.bf16 %v609, %v609
  %613 = vrot.lane.b32.xlu0 %v611, 32
  %v614 = vpop.permute.xlu0 %613
  %v616 = vsel %vm172, %v614, 0
  %618 = vmatpush.bf16.msra.mxu0 0
  %619 = vmatpush.bf16.msra.mxu0 0
  %620 = vmatpush.bf16.msra.mxu0 0
  %621 = vmatpush.bf16.msra.mxu0 0
  %622 = vmatpush.bf16.msra.mxu0 0
  %623 = vmatpush.bf16.msra.mxu0 0
  %624 = vmatpush.bf16.msra.mxu0 %v59
  %625 = vmatpush.bf16.msra.mxu0 %v58
  %626 = vmatmul.bf16.gmra.mxu0 %v616
  %v627 = vpop.f32.mrf.mxu0
  %v628 = vadd.f32 0.0, %v627
  %v629 = vpop.f32.mrf.mxu0
  %630 = vdwg.mxu0
  %v631 = vadd.f32 %v610, %v628
  %v632 = vmul.f32 %v631, 0.5
  %v633 = vtanh.pop %v632
  %v634 = vmul.f32 %v633, 0.5
  %v635 = vadd.f32 %v634, 0.5
  %v636 = vtanh.pop %v631
  %638 = vrot.lane.b32.xlu0 %v636, 64
  %v639 = vpop.permute.xlu0 %638
  %v641 = vmul.f32 %v635, %v639
  %643 = vrot.lane.b32.xlu0 %v603, 32
  %v644 = vpop.permute.xlu0 %643
  %v646 = vmul.f32 %v635, %v644
  %648 = vrot.lane.b32.xlu0 %v641, 32
  %v649 = vpop.permute.xlu0 %648
  %v651 = vadd.f32 %v646, %v649
  %v652 = vtanh.pop %v651
  %654 = vrot.lane.b32.xlu0 %v652, 64
  %v655 = vpop.permute.xlu0 %654
  %v657 = vmul.f32 %v635, %v655
  %v658 = vld [vmem:[#allocation2 + $0x10] sm:$0xff]
  %v659 = vpack.c.bf16 %v657, %v657
  %661 = vrot.lane.b32.xlu0 %v659, 32
  %v662 = vpop.permute.xlu0 %661
  %v664 = vsel %vm172, %v662, 0
  %666 = vmatpush.bf16.msra.mxu0 0
  %667 = vmatpush.bf16.msra.mxu0 0
  %668 = vmatpush.bf16.msra.mxu0 0
  %669 = vmatpush.bf16.msra.mxu0 0
  %670 = vmatpush.bf16.msra.mxu0 0
  %671 = vmatpush.bf16.msra.mxu0 0
  %672 = vmatpush.bf16.msra.mxu0 %v59
  %673 = vmatpush.bf16.msra.mxu0 %v58
  %674 = vmatmul.bf16.gmra.mxu0 %v664
  %v675 = vpop.f32.mrf.mxu0
  %v676 = vadd.f32 0.0, %v675
  %v677 = vpop.f32.mrf.mxu0
  %678 = vdwg.mxu0
  %v679 = vadd.f32 %v658, %v676
  %v680 = vmul.f32 %v679, 0.5
  %v681 = vtanh.pop %v680
  %v682 = vmul.f32 %v681, 0.5
  %v683 = vadd.f32 %v682, 0.5
  %v684 = vtanh.pop %v679
  %686 = vrot.lane.b32.xlu0 %v684, 64
  %v687 = vpop.permute.xlu0 %686
  %v689 = vmul.f32 %v683, %v687
  %v690 = vmul.f32 %v683, %v651
  %692 = vrot.lane.b32.xlu0 %v689, 32
  %v693 = vpop.permute.xlu0 %692
  %v695 = vadd.f32 %v690, %v693
  %v696 = vtanh.pop %v695
  %698 = vrot.lane.b32.xlu0 %v696, 64
  %v699 = vpop.permute.xlu0 %698
  %v701 = vmul.f32 %v683, %v699
  %v702 = vld [vmem:[#allocation2 + $0x18] sm:$0xff]
  %v703 = vpack.c.bf16 %v701, %v701
  %705 = vrot.lane.b32.xlu0 %v703, 32
  %v706 = vpop.permute.xlu0 %705
  %v708 = vsel %vm172, %v706, 0
  %710 = vmatpush.bf16.msra.mxu0 0
  %711 = vmatpush.bf16.msra.mxu0 0
  %712 = vmatpush.bf16.msra.mxu0 0
  %713 = vmatpush.bf16.msra.mxu0 0
  %714 = vmatpush.bf16.msra.mxu0 0
  %715 = vmatpush.bf16.msra.mxu0 0
  %716 = vmatpush.bf16.msra.mxu0 %v59
  %717 = vmatpush.bf16.msra.mxu0 %v58
  %718 = vmatmul.bf16.gmra.mxu0 %v708
  %v719 = vpop.f32.mrf.mxu0
  %v720 = vadd.f32 0.0, %v719
  %v721 = vpop.f32.mrf.mxu0
  %722 = vdwg.mxu0
  %v723 = vadd.f32 %v702, %v720
  %v724 = vmul.f32 %v723, 0.5
  %v725 = vtanh.pop %v724
  %v726 = vmul.f32 %v725, 0.5
  %v727 = vadd.f32 %v726, 0.5
  %v728 = vtanh.pop %v723
  %730 = vrot.lane.b32.xlu0 %v728, 64
  %v731 = vpop.permute.xlu0 %730
  %v733 = vmul.f32 %v727, %v731
  %v734 = vmul.f32 %v727, %v695
  %736 = vrot.lane.b32.xlu0 %v733, 32
  %v737 = vpop.permute.xlu0 %736
  %v739 = vadd.f32 %v734, %v737
  %v740 = vtanh.pop %v739
  %742 = vrot.lane.b32.xlu0 %v740, 64
  %v743 = vpop.permute.xlu0 %742
  %v745 = vmul.f32 %v727, %v743
  %v746 = vld [vmem:[#allocation2 + $0x20] sm:$0xff]
  %v747 = vpack.c.bf16 %v745, %v745
  %749 = vrot.lane.b32.xlu0 %v747, 32
  %v750 = vpop.permute.xlu0 %749
  %v752 = vsel %vm172, %v750, 0
  %754 = vmatpush.bf16.msra.mxu0 0
  %755 = vmatpush.bf16.msra.mxu0 0
  %756 = vmatpush.bf16.msra.mxu0 0
  %757 = vmatpush.bf16.msra.mxu0 0
  %758 = vmatpush.bf16.msra.mxu0 0
  %759 = vmatpush.bf16.msra.mxu0 0
  %760 = vmatpush.bf16.msra.mxu0 %v59
  %761 = vmatpush.bf16.msra.mxu0 %v58
  %762 = vmatmul.bf16.gmra.mxu0 %v752
  %v763 = vpop.f32.mrf.mxu0
  %v764 = vadd.f32 0.0, %v763
  %v765 = vpop.f32.mrf.mxu0
  %766 = vdwg.mxu0
  %v767 = vadd.f32 %v746, %v764
  %v768 = vmul.f32 %v767, 0.5
  %v769 = vtanh.pop %v768
  %v770 = vmul.f32 %v769, 0.5
  %v771 = vadd.f32 %v770, 0.5
  %v772 = vtanh.pop %v767
  %774 = vrot.lane.b32.xlu0 %v772, 64
  %v775 = vpop.permute.xlu0 %774
  %v777 = vmul.f32 %v771, %v775
  %v778 = vmul.f32 %v771, %v739
  %780 = vrot.lane.b32.xlu0 %v777, 32
  %v781 = vpop.permute.xlu0 %780
  %v783 = vadd.f32 %v778, %v781
  %v784 = vtanh.pop %v783
  %786 = vrot.lane.b32.xlu0 %v784, 64
  %v787 = vpop.permute.xlu0 %786
  %v789 = vmul.f32 %v771, %v787
  %v790 = vld [vmem:[#allocation2 + $0x28] sm:$0xff]
  %v791 = vpack.c.bf16 %v789, %v789
  %793 = vrot.lane.b32.xlu0 %v791, 32
  %v794 = vpop.permute.xlu0 %793
  %v796 = vsel %vm172, %v794, 0
  %798 = vmatpush.bf16.msra.mxu0 0
  %799 = vmatpush.bf16.msra.mxu0 0
  %800 = vmatpush.bf16.msra.mxu0 0
  %801 = vmatpush.bf16.msra.mxu0 0
  %802 = vmatpush.bf16.msra.mxu0 0
  %803 = vmatpush.bf16.msra.mxu0 0
  %804 = vmatpush.bf16.msra.mxu0 %v59
  %805 = vmatpush.bf16.msra.mxu0 %v58
  %806 = vmatmul.bf16.gmra.mxu0 %v796
  %v807 = vpop.f32.mrf.mxu0
  %v808 = vadd.f32 0.0, %v807
  %v809 = vpop.f32.mrf.mxu0
  %810 = vdwg.mxu0
  %v811 = vadd.f32 %v790, %v808
  %v812 = vmul.f32 %v811, 0.5
  %v813 = vtanh.pop %v812
  %v814 = vmul.f32 %v813, 0.5
  %v815 = vadd.f32 %v814, 0.5
  %v816 = vtanh.pop %v811
  %818 = vrot.lane.b32.xlu0 %v816, 64
  %v819 = vpop.permute.xlu0 %818
  %v821 = vmul.f32 %v815, %v819
  %v822 = vmul.f32 %v815, %v783
  %824 = vrot.lane.b32.xlu0 %v821, 32
  %v825 = vpop.permute.xlu0 %824
  %v827 = vadd.f32 %v822, %v825
  %v828 = vtanh.pop %v827
  %830 = vrot.lane.b32.xlu0 %v828, 64
  %v831 = vpop.permute.xlu0 %830
  %v833 = vmul.f32 %v815, %v831
  %v834 = vld [vmem:[#allocation2 + $0x30] sm:$0xff]
  %v835 = vpack.c.bf16 %v833, %v833
  %837 = vrot.lane.b32.xlu0 %v835, 32
  %v838 = vpop.permute.xlu0 %837
  %v840 = vsel %vm172, %v838, 0
  %842 = vmatpush.bf16.msra.mxu0 0
  %843 = vmatpush.bf16.msra.mxu0 0
  %844 = vmatpush.bf16.msra.mxu0 0
  %845 = vmatpush.bf16.msra.mxu0 0
  %846 = vmatpush.bf16.msra.mxu0 0
  %847 = vmatpush.bf16.msra.mxu0 0
  %848 = vmatpush.bf16.msra.mxu0 %v59
  %849 = vmatpush.bf16.msra.mxu0 %v58
  %850 = vmatmul.bf16.gmra.mxu0 %v840
  %v851 = vpop.f32.mrf.mxu0
  %v852 = vadd.f32 0.0, %v851
  %v853 = vpop.f32.mrf.mxu0
  %854 = vdwg.mxu0
  %v855 = vadd.f32 %v834, %v852
  %v856 = vmul.f32 %v855, 0.5
  %v857 = vtanh.pop %v856
  %v858 = vmul.f32 %v857, 0.5
  %v859 = vadd.f32 %v858, 0.5
  %v860 = vtanh.pop %v855
  %862 = vrot.lane.b32.xlu0 %v860, 64
  %v863 = vpop.permute.xlu0 %862
  %v865 = vmul.f32 %v859, %v863
  %v866 = vmul.f32 %v859, %v827
  %868 = vrot.lane.b32.xlu0 %v865, 32
  %v869 = vpop.permute.xlu0 %868
  %v871 = vadd.f32 %v866, %v869
  %v872 = vtanh.pop %v871
  %874 = vrot.lane.b32.xlu0 %v872, 64
  %v875 = vpop.permute.xlu0 %874
  %v877 = vmul.f32 %v859, %v875
  %v878 = vld [vmem:[#allocation2 + $0x38] sm:$0xff]
  %v879 = vpack.c.bf16 %v877, %v877
  %881 = vrot.lane.b32.xlu0 %v879, 32
  %v882 = vpop.permute.xlu0 %881
  %v884 = vsel %vm172, %v882, 0
  %886 = vmatpush.bf16.msra.mxu0 0
  %887 = vmatpush.bf16.msra.mxu0 0
  %888 = vmatpush.bf16.msra.mxu0 0
  %889 = vmatpush.bf16.msra.mxu0 0
  %890 = vmatpush.bf16.msra.mxu0 0
  %891 = vmatpush.bf16.msra.mxu0 0
  %892 = vmatpush.bf16.msra.mxu0 %v59
  %893 = vmatpush.bf16.msra.mxu0 %v58
  %894 = vmatmul.bf16.gmra.mxu0 %v884
  %v895 = vpop.f32.mrf.mxu0
  %v896 = vadd.f32 0.0, %v895
  %v897 = vpop.f32.mrf.mxu0
  %898 = vdwg.mxu0
  %v899 = vadd.f32 %v878, %v896
  %v900 = vmul.f32 %v899, 0.5
  %v901 = vtanh.pop %v900
  %v902 = vmul.f32 %v901, 0.5
  %v903 = vadd.f32 %v902, 0.5
  %v904 = vtanh.pop %v899
  %906 = vrot.lane.b32.xlu0 %v904, 64
  %v907 = vpop.permute.xlu0 %906
  %v909 = vmul.f32 %v903, %v907
  %v910 = vmul.f32 %v903, %v871
  %912 = vrot.lane.b32.xlu0 %v909, 32
  %v913 = vpop.permute.xlu0 %912
  %v915 = vadd.f32 %v910, %v913
  %v916 = vtanh.pop %v915
  %918 = vrot.lane.b32.xlu0 %v916, 64
  %v919 = vpop.permute.xlu0 %918
  %v921 = vmul.f32 %v903, %v919
  %v922 = vmax.f32 %v571, 0.0
  %v923 = vmax.f32 %v921, 0.0
  %v924 = vpack.c.bf16 %v923, %v922
  %v925 = vld [vmem:[%s8] sm:$0x1]
  %v927 = vperm.slane %v925, 0
  %930 = vrot.lane.b32.xlu0 %v924, 32
  %v931 = vpop.permute.xlu0 %930
  %v933 = vsel %vm172, %v931, 0
  %935 = vmatpush.bf16.msra.mxu0 0
  %936 = vmatpush.bf16.msra.mxu0 0
  %937 = vmatpush.bf16.msra.mxu0 0
  %938 = vmatpush.bf16.msra.mxu0 0
  %939 = vmatpush.bf16.msra.mxu0 0
  %940 = vmatpush.bf16.msra.mxu0 0
  %941 = vmatpush.bf16.msra.mxu0 %v67
  %942 = vmatpush.bf16.msra.mxu0 %v66
  %943 = vmatmul.bf16.gmra.mxu0 %v933
  %v944 = vpop.f32.mrf.mxu0
  %v945 = vadd.f32 %v927, %v944
  %v946 = vpop.f32.mrf.mxu0
  %v947 = vadd.f32 %v927, %v946
  %948 = vdwg.mxu0
  %v949 = vmax.f32 %v945, 0.0
  %v950 = vmax.f32 %v947, 0.0
  %v951 = vpack.c.bf16 %v950, %v949
  %v952 = vld [vmem:[%s10] sm:$0x1]
  %v954 = vperm.slane %v952, 0
  %956 = vmatpush.bf16.msra.mxu0 %v91
  %957 = vmatpush.bf16.msra.mxu0 %v90
  %958 = vmatpush.bf16.msra.mxu0 %v89
  %959 = vmatpush.bf16.msra.mxu0 %v88
  %960 = vmatpush.bf16.msra.mxu0 %v87
  %961 = vmatpush.bf16.msra.mxu0 %v86
  %962 = vmatpush.bf16.msra.mxu0 %v85
  %963 = vmatpush.bf16.msra.mxu0 %v84
  %964 = vmatmul.bf16.gmra.mxu0 %v951
  %v965 = vpop.f32.mrf.mxu0
  %v966 = vadd.f32 %v954, %v965
  %v967 = vpop.f32.mrf.mxu0
  %v968 = vadd.f32 %v954, %v967
  %969 = vdwg.mxu0
  %vm970 = vcmask 31744
  %971 = vst.msk [vmem:[%s11] sm:$0xff] %vm970, %v966
  %972 = vst.msk [vmem:[%s11 + $0x8] sm:$0xff] %vm970, %v968
  // Predicated region
  $region46: #{my_lstm_forward.1} parent=0 // pred_check
    _
  $region47: #{my_lstm_forward.1} parent=0 // pred_check_branch
    %974 = sbr.rel (0) target = $region49
  $region48: #{my_lstm_forward.1} parent=0 // pred_region
    _
  $region49: #{my_lstm_forward.1} parent=0 // pred_fallthru
    _
  // Predicated region
  $region50: #{my_lstm_forward.1} parent=0 // pred_check
    _
  $region51: #{my_lstm_forward.1} parent=0 // pred_check_branch
    %976 = sbr.rel (0) target = $region53
  $region52: #{my_lstm_forward.1} parent=0 // pred_region
    _
  $region53: #{my_lstm_forward.1} parent=0 // pred_fallthru
    _

</llo_original>
